<compile_context>
chip_gen: v7x
topology: tpu7x:2x2x1
jax: 0.10.0
libtpu: 0.0.40
codegen_flags: <defaults>
</compile_context>

<pallas_src>
import math

import jax
import jax.numpy as jnp
from jax.experimental import pallas as pl
from jax.experimental.pallas import tpu as pltpu

MAX_NEW_TOKENS = 512

# Module-level config (None placeholders in the reference file; must be set
# before the module is used).
chunk_size = 64
local_window = 16


def get_mscale(scale=1):
    if scale <= 1:
        return 1.0
    return 0.1 * math.log(scale) + 1.0


# Plain-JAX helper: cos/sin table for a vector of positions t.
def _cos_sin_from_t(t, inv_freq, mscale):
    freqs = jnp.outer(t, inv_freq)
    emb = jnp.concatenate([freqs, freqs], axis=-1)
    return jnp.cos(emb) * mscale, jnp.sin(emb) * mscale


# ---------------------------------------------------------------------------
# Pallas kernel: each grid step writes one (block_rows, dim) block of the cos
# cache and one of the sin cache.  Because the k positions repeat every
# chunk_len rows and block_rows is a multiple of chunk_len, every output block
# is exactly the (pre-tiled) periodic table — the kernel is a pure copy/store.
# ---------------------------------------------------------------------------
def _k_rope_tile_kernel(cos_tbl_ref, sin_tbl_ref, cos_out_ref, sin_out_ref):
    cos_out_ref[...] = cos_tbl_ref[...]
    sin_out_ref[...] = sin_tbl_ref[...]


def build_k_rope_cache(inv_freq, total_len, chunk_len, scaling_factor, mscale,
                       *, target_rows=3072):
    """cos/sin caches for k positions ((arange(total_len) % chunk_len) / scale).

    Returns (cos, sin), each [total_len, dim] float32.
    """
    chunk_len = int(chunk_len)
    total_len = int(total_len)
    dim = 2 * inv_freq.shape[0]

    # One-time, tiny transcendental work in plain JAX: the chunk_len-row
    # periodic table.
    t = jnp.arange(chunk_len, dtype=jnp.float32) / float(scaling_factor)
    cos_p, sin_p = _cos_sin_from_t(t, inv_freq.astype(jnp.float32), float(mscale))

    # Block rows: a multiple of chunk_len (so each block is an exact tiling of
    # the period) and of 8 (sublane alignment), near target_rows, never much
    # larger than the cache itself.
    base_rows = chunk_len * (8 // math.gcd(chunk_len, 8))
    reps = max(1, min(max(1, target_rows // base_rows),
                      pl.cdiv(total_len, base_rows)))
    block_rows = reps * base_rows
    n_blocks = pl.cdiv(total_len, block_rows)

    # Pre-tile the period table to exactly one output block (stays
    # VMEM-resident in the kernel via a constant index_map).
    cos_tbl = jnp.tile(cos_p, (block_rows // chunk_len, 1))
    sin_tbl = jnp.tile(sin_p, (block_rows // chunk_len, 1))

    cos, sin = pl.pallas_call(
        _k_rope_tile_kernel,
        out_shape=(jax.ShapeDtypeStruct((total_len, dim), jnp.float32),
                   jax.ShapeDtypeStruct((total_len, dim), jnp.float32)),
        grid=(n_blocks,),
        in_specs=[pl.BlockSpec((block_rows, dim), lambda i: (0, 0)),
                  pl.BlockSpec((block_rows, dim), lambda i: (0, 0))],
        out_specs=(pl.BlockSpec((block_rows, dim), lambda i: (i, 0)),
                   pl.BlockSpec((block_rows, dim), lambda i: (i, 0))),
        compiler_params=pltpu.CompilerParams(
            dimension_semantics=("parallel",),   # safe: no program_id-gated init
            vmem_limit_bytes=32 * 1024 * 1024,
        ),
    )(cos_tbl, sin_tbl)
    return cos, sin


# ---------------------------------------------------------------------------
# JAX port of ChunkLlamaRotaryEmbedding
# ---------------------------------------------------------------------------
class ChunkLlamaRotaryEmbedding:
    def __init__(self, dim=None, max_position_embeddings=4096, base=10000,
                 scaling_factor=1.0):
        self.max_seq_len = max_position_embeddings
        self.dim = dim
        self.scaling_factor = scaling_factor
        self.max_position_embeddings = max_position_embeddings
        self.base = base
        self._cast_dtype = None
        self._cast_caches = None
        self._set_cos_sin_cache(seq_len=self.max_seq_len)

    def _set_cos_sin_cache(self, seq_len):
        scale = seq_len / self.max_position_embeddings
        mscale = get_mscale(scale)
        inv_freq = 1.0 / (self.base ** (jnp.arange(0, self.dim, 2,
                                                   dtype=jnp.float32) / self.dim))
        self.inv_freq = inv_freq

        chunk_len = chunk_size - local_window

        # q/qc caches are sub-vreg scale (chunk_len rows) -> plain JAX.
        q_t = jnp.arange(chunk_len, dtype=jnp.float32) / self.scaling_factor
        qc_t = jnp.minimum(jnp.arange(chunk_len, dtype=jnp.float32) + chunk_len,
                           float(chunk_size)) / self.scaling_factor
        self.q_cos_cached, self.q_sin_cached = _cos_sin_from_t(q_t, inv_freq, mscale)
        self.qc_cos_cached, self.qc_sin_cached = _cos_sin_from_t(qc_t, inv_freq, mscale)

        # Large k cache (seq_len + MAX_NEW_TOKENS rows) -> Pallas kernel
        # (pure tile-and-store of the periodic table).
        total_len = seq_len + MAX_NEW_TOKENS
        self.k_cos_cached, self.k_sin_cached = build_k_rope_cache(
            inv_freq, total_len, chunk_len, self.scaling_factor, mscale)

        self._caches_f32 = (self.q_cos_cached, self.q_sin_cached,
                            self.qc_cos_cached, self.qc_sin_cached,
                            self.k_cos_cached, self.k_sin_cached)
        # Invalidate any memoized dtype-cast copies.
        self._cast_dtype = None
        self._cast_caches = None

    def __call__(self, x, seq_len=None):
        if seq_len > self.max_seq_len:
            self._set_cos_sin_cache(seq_len=seq_len)
            self.max_seq_len = seq_len
        dt = x.dtype
        if self._cast_dtype != dt:
            # One-time per consumer dtype; no-op (no copy) when dt == float32.
            self._cast_caches = tuple(c if c.dtype == dt else c.astype(dt)
                                      for c in self._caches_f32)
            self._cast_dtype = dt
        q_cos, q_sin, qc_cos, qc_sin, k_cos, k_sin = self._cast_caches
        # NOTE: q/qc caches only hold chunk_len rows; slicing with a larger
        # seq_len silently returns fewer rows (mirrors the PyTorch module).
        return (q_cos[:seq_len], q_sin[:seq_len],
                qc_cos[:seq_len], qc_sin[:seq_len],
                k_cos[:seq_len], k_sin[:seq_len])


# ---------------------------------------------------------------------------
# Self-test
# ---------------------------------------------------------------------------
if __name__ == "__main__":
    dim = 64
    max_pos = 128
    rope = ChunkLlamaRotaryEmbedding(dim=dim, max_position_embeddings=max_pos,
                                     base=10000, scaling_factor=1.0)

    # Small example input (batch=2, heads=2, seq=8, head_dim=64)
    key = jax.random.PRNGKey(0)
    x = jax.random.normal(key, (2, 2, 8, dim), dtype=jnp.float32)
    seq_len = 8

    outs = rope(x, seq_len=seq_len)
    outs = jax.block_until_ready(outs)

    # Pure-JAX reference
    chunk_len = chunk_size - local_window
    scale = rope.max_seq_len / rope.max_position_embeddings
    mscale = get_mscale(scale)
    inv_freq = rope.inv_freq
    q_t = jnp.arange(chunk_len, dtype=jnp.float32) / rope.scaling_factor
    qc_t = jnp.minimum(jnp.arange(chunk_len, dtype=jnp.float32) + chunk_len,
                       float(chunk_size)) / rope.scaling_factor
    k_t = (jnp.arange(rope.max_seq_len + MAX_NEW_TOKENS, dtype=jnp.float32)
           % chunk_len) / rope.scaling_factor

    refs = []
    for t in (q_t, qc_t, k_t):
        c, s = _cos_sin_from_t(t, inv_freq, mscale)
        refs.extend([c[:seq_len].astype(x.dtype), s[:seq_len].astype(x.dtype)])

    # Check the full Pallas-built k cache, not just the [:seq_len] slice.
    k_cos_ref, k_sin_ref = _cos_sin_from_t(k_t, inv_freq, mscale)
    assert rope.k_cos_cached.shape == k_cos_ref.shape, (
        rope.k_cos_cached.shape, k_cos_ref.shape)
    assert jnp.allclose(rope.k_cos_cached, k_cos_ref, atol=1e-4, rtol=1e-4)
    assert jnp.allclose(rope.k_sin_cached, k_sin_ref, atol=1e-4, rtol=1e-4)

    for got, want in zip(outs, refs):
        assert got.shape == want.shape, (got.shape, want.shape)
        assert got.dtype == want.dtype, (got.dtype, want.dtype)
        assert jnp.allclose(got, want, atol=1e-4, rtol=1e-4)

    print("KERNEL_OK")
</pallas_src>

<mosaic_0001>
module attributes {stable_mosaic.version = 11 : i64} {
  func.func @_k_rope_tile_kernel(%arg0: i32, %arg1: memref<672x64xf32, #tpu.memory_space<vmem>>, %arg2: memref<672x64xf32, #tpu.memory_space<vmem>>, %arg3: memref<672x64xf32, #tpu.memory_space<vmem>>, %arg4: memref<672x64xf32, #tpu.memory_space<vmem>>) attributes {dimension_semantics = [#tpu.dimension_semantics<parallel>], iteration_bounds = array<i64: 1>, scalar_prefetch = 0 : i64, scratch_operands = 0 : i64, tpu.core_type = #tpu.core_type<tc>, window_params = [{pipeline_mode = #tpu.pipeline_mode<synchronous>, transform_indices = @transform_0, window_bounds = array<i64: 672, 64>}, {pipeline_mode = #tpu.pipeline_mode<synchronous>, transform_indices = @transform_1, window_bounds = array<i64: 672, 64>}, {transform_indices = @transform_2, window_bounds = array<i64: 672, 64>}, {transform_indices = @transform_3, window_bounds = array<i64: 672, 64>}]} {
    %c0 = arith.constant 0 : index
    %c0_0 = arith.constant 0 : index
    %0 = vector.load %arg1[%c0, %c0_0] : memref<672x64xf32, #tpu.memory_space<vmem>>, vector<672x64xf32>
    %c0_1 = arith.constant 0 : index
    %c0_2 = arith.constant 0 : index
    %1 = vector.load %arg3[%c0_1, %c0_2] : memref<672x64xf32, #tpu.memory_space<vmem>>, vector<672x64xf32>
    tpu.vector_store %arg3[%c0_1, %c0_2], %0 {strides = array<i32>} : memref<672x64xf32, #tpu.memory_space<vmem>>, vector<672x64xf32>,
    %c0_3 = arith.constant 0 : index
    %c0_4 = arith.constant 0 : index
    %2 = vector.load %arg2[%c0_3, %c0_4] : memref<672x64xf32, #tpu.memory_space<vmem>>, vector<672x64xf32>
    %c0_5 = arith.constant 0 : index
    %c0_6 = arith.constant 0 : index
    %3 = vector.load %arg4[%c0_5, %c0_6] : memref<672x64xf32, #tpu.memory_space<vmem>>, vector<672x64xf32>
    tpu.vector_store %arg4[%c0_5, %c0_6], %2 {strides = array<i32>} : memref<672x64xf32, #tpu.memory_space<vmem>>, vector<672x64xf32>,
    return
  }
  func.func @transform_0(%arg0: i32) -> (i32, i32) {
    %c0_i32 = arith.constant 0 : i32
    %c0_i32_0 = arith.constant 0 : i32
    %c0_i32_1 = arith.constant 0 : i32
    return %c0_i32, %c0_i32_0 : i32, i32
  }
  func.func @transform_1(%arg0: i32) -> (i32, i32) {
    %c0_i32 = arith.constant 0 : i32
    %c0_i32_0 = arith.constant 0 : i32
    %c0_i32_1 = arith.constant 0 : i32
    return %c0_i32, %c0_i32_0 : i32, i32
  }
  func.func @transform_2(%arg0: i32) -> (i32, i32) {
    %c0_i32 = arith.constant 0 : i32
    %c0_i32_0 = arith.constant 0 : i32
    return %arg0, %c0_i32 : i32, i32
  }
  func.func @transform_3(%arg0: i32) -> (i32, i32) {
    %c0_i32 = arith.constant 0 : i32
    %c0_i32_0 = arith.constant 0 : i32
    return %arg0, %c0_i32 : i32, i32
  }
}

</mosaic_0001>

<llo_original>
// kernel: tpu_custom_call.1
$region0: #{tpu_custom_call.1}
  #allocation0 [shape = 'u32[]', space=smem, size = 0x4, offset = 0x4, fixed_abs, tag = 'smem constant byte address 0x4 - core index']
  #allocation1 [shape = 'u32[144,128]{1,0:T(1,128)}', space=vmem, size = 0x12000, scoped, tag = 'internal scratch']
  %s0 = inlined_call_operand.vmem [shape: f32[672,64], index: 0, kind: input, shape index: {}]
  %s1 = inlined_call_operand.vmem [shape: f32[672,64], index: 1, kind: input, shape index: {}]
  %s2 = inlined_call_operand.vmem [shape: f32[640,64], index: 2, kind: output, shape index: {0}]
  %s3 = inlined_call_operand.vmem [shape: f32[640,64], index: 3, kind: output, shape index: {1}]
  %4 = xla_tuple %s2, %s3
  %s5 = sld [smem:[#allocation0]]
  $region94: #{tpu_custom_call.1} parent=0
    _
  %s7 = ssub.s32 1, %s5
  %s8 = scalar_select 0, %s7, %s5
  $region1: #{tpu_custom_call.1} parent=0
    #allocation2 [shape = 'u8[344064]{0}', space=vmem, size = 0x54000, scoped, tag = 'output window, operand 0, single buffered']
    #allocation3 [shape = 'u8[344064]{0}', space=vmem, size = 0x54000, scoped, tag = 'output window, operand 1, single buffered']
    // Predicated region
    $region2: #{tpu_custom_call.1} parent=1 // pred_check
      _
    $region3: #{tpu_custom_call.1} parent=1 // pred_check_branch
      %10 = sbr.rel (0) target = $region5
    $region4: #{tpu_custom_call.1} parent=1 // pred_region
      _
    $region5: #{tpu_custom_call.1} parent=1 // pred_fallthru
      _
    // Predicated region
    $region6: #{tpu_custom_call.1} parent=1 // pred_check
      _
    $region7: #{tpu_custom_call.1} parent=1 // pred_check_branch
      %12 = sbr.rel (0) target = $region9
    $region8: #{tpu_custom_call.1} parent=1 // pred_region
      _
    $region9: #{tpu_custom_call.1} parent=1 // pred_fallthru
      _
    %v13 = vld [vmem:[%s0] sm:$0xff]
    %v14 = vld [vmem:[%s0 + $0x8] sm:$0xff]
    %v15 = vld [vmem:[%s0 + $0x10] sm:$0xff]
    %v16 = vld [vmem:[%s0 + $0x18] sm:$0xff]
    %v17 = vld [vmem:[%s0 + $0x20] sm:$0xff]
    %v18 = vld [vmem:[%s0 + $0x28] sm:$0xff]
    %v19 = vld [vmem:[%s0 + $0x30] sm:$0xff]
    %v20 = vld [vmem:[%s0 + $0x38] sm:$0xff]
    %v21 = vld [vmem:[%s0 + $0x40] sm:$0xff]
    %v22 = vld [vmem:[%s0 + $0x48] sm:$0xff]
    %v23 = vld [vmem:[%s0 + $0x50] sm:$0xff]
    %v24 = vld [vmem:[%s0 + $0x58] sm:$0xff]
    %v25 = vld [vmem:[%s0 + $0x60] sm:$0xff]
    %v26 = vld [vmem:[%s0 + $0x68] sm:$0xff]
    %v27 = vld [vmem:[%s0 + $0x70] sm:$0xff]
    %v28 = vld [vmem:[%s0 + $0x78] sm:$0xff]
    %v29 = vld [vmem:[%s0 + $0x80] sm:$0xff]
    %v30 = vld [vmem:[%s0 + $0x88] sm:$0xff]
    %v31 = vld [vmem:[%s0 + $0x90] sm:$0xff]
    %v32 = vld [vmem:[%s0 + $0x98] sm:$0xff]
    %v33 = vld [vmem:[%s0 + $0xa0] sm:$0xff]
    %v34 = vld [vmem:[%s0 + $0xa8] sm:$0xff]
    %v35 = vld [vmem:[%s0 + $0xb0] sm:$0xff]
    %v36 = vld [vmem:[%s0 + $0xb8] sm:$0xff]
    %v37 = vld [vmem:[%s0 + $0xc0] sm:$0xff]
    %v38 = vld [vmem:[%s0 + $0xc8] sm:$0xff]
    %v39 = vld [vmem:[%s0 + $0xd0] sm:$0xff]
    %v40 = vld [vmem:[%s0 + $0xd8] sm:$0xff]
    %v41 = vld [vmem:[%s0 + $0xe0] sm:$0xff]
    %v42 = vld [vmem:[%s0 + $0xe8] sm:$0xff]
    %v43 = vld [vmem:[%s0 + $0xf0] sm:$0xff]
    %v44 = vld [vmem:[%s0 + $0xf8] sm:$0xff]
    %v45 = vld [vmem:[%s0 + $0x100] sm:$0xff]
    %v46 = vld [vmem:[%s0 + $0x108] sm:$0xff]
    %v47 = vld [vmem:[%s0 + $0x110] sm:$0xff]
    %v48 = vld [vmem:[%s0 + $0x118] sm:$0xff]
    %v49 = vld [vmem:[%s0 + $0x120] sm:$0xff]
    %v50 = vld [vmem:[%s0 + $0x128] sm:$0xff]
    %v51 = vld [vmem:[%s0 + $0x130] sm:$0xff]
    %v52 = vld [vmem:[%s0 + $0x138] sm:$0xff]
    %v53 = vld [vmem:[%s0 + $0x140] sm:$0xff]
    %v54 = vld [vmem:[%s0 + $0x148] sm:$0xff]
    %v55 = vld [vmem:[%s0 + $0x150] sm:$0xff]
    %v56 = vld [vmem:[%s0 + $0x158] sm:$0xff]
    %v57 = vld [vmem:[%s0 + $0x160] sm:$0xff]
    %v58 = vld [vmem:[%s0 + $0x168] sm:$0xff]
    %v59 = vld [vmem:[%s0 + $0x170] sm:$0xff]
    %v60 = vld [vmem:[%s0 + $0x178] sm:$0xff]
    %v61 = vld [vmem:[%s0 + $0x180] sm:$0xff]
    %v62 = vld [vmem:[%s0 + $0x188] sm:$0xff]
    %v63 = vld [vmem:[%s0 + $0x190] sm:$0xff]
    %v64 = vld [vmem:[%s0 + $0x198] sm:$0xff]
    %v65 = vld [vmem:[%s0 + $0x1a0] sm:$0xff]
    %v66 = vld [vmem:[%s0 + $0x1a8] sm:$0xff]
    %v67 = vld [vmem:[%s0 + $0x1b0] sm:$0xff]
    %v68 = vld [vmem:[%s0 + $0x1b8] sm:$0xff]
    %v69 = vld [vmem:[%s0 + $0x1c0] sm:$0xff]
    %v70 = vld [vmem:[%s0 + $0x1c8] sm:$0xff]
    %v71 = vld [vmem:[%s0 + $0x1d0] sm:$0xff]
    %v72 = vld [vmem:[%s0 + $0x1d8] sm:$0xff]
    %v73 = vld [vmem:[%s0 + $0x1e0] sm:$0xff]
    %v74 = vld [vmem:[%s0 + $0x1e8] sm:$0xff]
    %v75 = vld [vmem:[%s0 + $0x1f0] sm:$0xff]
    %v76 = vld [vmem:[%s0 + $0x1f8] sm:$0xff]
    %v77 = vld [vmem:[%s0 + $0x200] sm:$0xff]
    %v78 = vld [vmem:[%s0 + $0x208] sm:$0xff]
    %v79 = vld [vmem:[%s0 + $0x210] sm:$0xff]
    %v80 = vld [vmem:[%s0 + $0x218] sm:$0xff]
    %v81 = vld [vmem:[%s0 + $0x220] sm:$0xff]
    %v82 = vld [vmem:[%s0 + $0x228] sm:$0xff]
    %v83 = vld [vmem:[%s0 + $0x230] sm:$0xff]
    %v84 = vld [vmem:[%s0 + $0x238] sm:$0xff]
    %v85 = vld [vmem:[%s0 + $0x240] sm:$0xff]
    %v86 = vld [vmem:[%s0 + $0x248] sm:$0xff]
    %v87 = vld [vmem:[%s0 + $0x250] sm:$0xff]
    %v88 = vld [vmem:[%s0 + $0x258] sm:$0xff]
    %v89 = vld [vmem:[%s0 + $0x260] sm:$0xff]
    %v90 = vld [vmem:[%s0 + $0x268] sm:$0xff]
    %v91 = vld [vmem:[%s0 + $0x270] sm:$0xff]
    %v92 = vld [vmem:[%s0 + $0x278] sm:$0xff]
    %v93 = vld [vmem:[%s0 + $0x280] sm:$0xff]
    %v94 = vld [vmem:[%s0 + $0x288] sm:$0xff]
    %v95 = vld [vmem:[%s0 + $0x290] sm:$0xff]
    %v96 = vld [vmem:[%s0 + $0x298] sm:$0xff]
    %vm97 = vcmask 523264
    %98 = vst.msk [vmem:[#allocation2] sm:$0xff] %vm97, %v13
    %99 = vst.msk [vmem:[#allocation2 + $0x8] sm:$0xff] %vm97, %v14
    %100 = vst.msk [vmem:[#allocation2 + $0x10] sm:$0xff] %vm97, %v15
    %101 = vst.msk [vmem:[#allocation2 + $0x18] sm:$0xff] %vm97, %v16
    %102 = vst.msk [vmem:[#allocation2 + $0x20] sm:$0xff] %vm97, %v17
    %103 = vst.msk [vmem:[#allocation2 + $0x28] sm:$0xff] %vm97, %v18
    %104 = vst.msk [vmem:[#allocation2 + $0x30] sm:$0xff] %vm97, %v19
    %105 = vst.msk [vmem:[#allocation2 + $0x38] sm:$0xff] %vm97, %v20
    %106 = vst.msk [vmem:[#allocation2 + $0x40] sm:$0xff] %vm97, %v21
    %107 = vst.msk [vmem:[#allocation2 + $0x48] sm:$0xff] %vm97, %v22
    %108 = vst.msk [vmem:[#allocation2 + $0x50] sm:$0xff] %vm97, %v23
    %109 = vst.msk [vmem:[#allocation2 + $0x58] sm:$0xff] %vm97, %v24
    %110 = vst.msk [vmem:[#allocation2 + $0x60] sm:$0xff] %vm97, %v25
    %111 = vst.msk [vmem:[#allocation2 + $0x68] sm:$0xff] %vm97, %v26
    %112 = vst.msk [vmem:[#allocation2 + $0x70] sm:$0xff] %vm97, %v27
    %113 = vst.msk [vmem:[#allocation2 + $0x78] sm:$0xff] %vm97, %v28
    %114 = vst.msk [vmem:[#allocation2 + $0x80] sm:$0xff] %vm97, %v29
    %115 = vst.msk [vmem:[#allocation2 + $0x88] sm:$0xff] %vm97, %v30
    %116 = vst.msk [vmem:[#allocation2 + $0x90] sm:$0xff] %vm97, %v31
    %117 = vst.msk [vmem:[#allocation2 + $0x98] sm:$0xff] %vm97, %v32
    %118 = vst.msk [vmem:[#allocation2 + $0xa0] sm:$0xff] %vm97, %v33
    %119 = vst.msk [vmem:[#allocation2 + $0xa8] sm:$0xff] %vm97, %v34
    %120 = vst.msk [vmem:[#allocation2 + $0xb0] sm:$0xff] %vm97, %v35
    %121 = vst.msk [vmem:[#allocation2 + $0xb8] sm:$0xff] %vm97, %v36
    %122 = vst.msk [vmem:[#allocation2 + $0xc0] sm:$0xff] %vm97, %v37
    %123 = vst.msk [vmem:[#allocation2 + $0xc8] sm:$0xff] %vm97, %v38
    %124 = vst.msk [vmem:[#allocation2 + $0xd0] sm:$0xff] %vm97, %v39
    %125 = vst.msk [vmem:[#allocation2 + $0xd8] sm:$0xff] %vm97, %v40
    %126 = vst.msk [vmem:[#allocation2 + $0xe0] sm:$0xff] %vm97, %v41
    %127 = vst.msk [vmem:[#allocation2 + $0xe8] sm:$0xff] %vm97, %v42
    %128 = vst.msk [vmem:[#allocation2 + $0xf0] sm:$0xff] %vm97, %v43
    %129 = vst.msk [vmem:[#allocation2 + $0xf8] sm:$0xff] %vm97, %v44
    %130 = vst.msk [vmem:[#allocation2 + $0x100] sm:$0xff] %vm97, %v45
    %131 = vst.msk [vmem:[#allocation2 + $0x108] sm:$0xff] %vm97, %v46
    %132 = vst.msk [vmem:[#allocation2 + $0x110] sm:$0xff] %vm97, %v47
    %133 = vst.msk [vmem:[#allocation2 + $0x118] sm:$0xff] %vm97, %v48
    %134 = vst.msk [vmem:[#allocation2 + $0x120] sm:$0xff] %vm97, %v49
    %135 = vst.msk [vmem:[#allocation2 + $0x128] sm:$0xff] %vm97, %v50
    %136 = vst.msk [vmem:[#allocation2 + $0x130] sm:$0xff] %vm97, %v51
    %137 = vst.msk [vmem:[#allocation2 + $0x138] sm:$0xff] %vm97, %v52
    %138 = vst.msk [vmem:[#allocation2 + $0x140] sm:$0xff] %vm97, %v53
    %139 = vst.msk [vmem:[#allocation2 + $0x148] sm:$0xff] %vm97, %v54
    %140 = vst.msk [vmem:[#allocation2 + $0x150] sm:$0xff] %vm97, %v55
    %141 = vst.msk [vmem:[#allocation2 + $0x158] sm:$0xff] %vm97, %v56
    %142 = vst.msk [vmem:[#allocation2 + $0x160] sm:$0xff] %vm97, %v57
    %143 = vst.msk [vmem:[#allocation2 + $0x168] sm:$0xff] %vm97, %v58
    %144 = vst.msk [vmem:[#allocation2 + $0x170] sm:$0xff] %vm97, %v59
    %145 = vst.msk [vmem:[#allocation2 + $0x178] sm:$0xff] %vm97, %v60
    %146 = vst.msk [vmem:[#allocation2 + $0x180] sm:$0xff] %vm97, %v61
    %147 = vst.msk [vmem:[#allocation2 + $0x188] sm:$0xff] %vm97, %v62
    %148 = vst.msk [vmem:[#allocation2 + $0x190] sm:$0xff] %vm97, %v63
    %149 = vst.msk [vmem:[#allocation2 + $0x198] sm:$0xff] %vm97, %v64
    %150 = vst.msk [vmem:[#allocation2 + $0x1a0] sm:$0xff] %vm97, %v65
    %151 = vst.msk [vmem:[#allocation2 + $0x1a8] sm:$0xff] %vm97, %v66
    %152 = vst.msk [vmem:[#allocation2 + $0x1b0] sm:$0xff] %vm97, %v67
    %153 = vst.msk [vmem:[#allocation2 + $0x1b8] sm:$0xff] %vm97, %v68
    %154 = vst.msk [vmem:[#allocation2 + $0x1c0] sm:$0xff] %vm97, %v69
    %155 = vst.msk [vmem:[#allocation2 + $0x1c8] sm:$0xff] %vm97, %v70
    %156 = vst.msk [vmem:[#allocation2 + $0x1d0] sm:$0xff] %vm97, %v71
    %157 = vst.msk [vmem:[#allocation2 + $0x1d8] sm:$0xff] %vm97, %v72
    %158 = vst.msk [vmem:[#allocation2 + $0x1e0] sm:$0xff] %vm97, %v73
    %159 = vst.msk [vmem:[#allocation2 + $0x1e8] sm:$0xff] %vm97, %v74
    %160 = vst.msk [vmem:[#allocation2 + $0x1f0] sm:$0xff] %vm97, %v75
    %161 = vst.msk [vmem:[#allocation2 + $0x1f8] sm:$0xff] %vm97, %v76
    %162 = vst.msk [vmem:[#allocation2 + $0x200] sm:$0xff] %vm97, %v77
    %163 = vst.msk [vmem:[#allocation2 + $0x208] sm:$0xff] %vm97, %v78
    %164 = vst.msk [vmem:[#allocation2 + $0x210] sm:$0xff] %vm97, %v79
    %165 = vst.msk [vmem:[#allocation2 + $0x218] sm:$0xff] %vm97, %v80
    %166 = vst.msk [vmem:[#allocation2 + $0x220] sm:$0xff] %vm97, %v81
    %167 = vst.msk [vmem:[#allocation2 + $0x228] sm:$0xff] %vm97, %v82
    %168 = vst.msk [vmem:[#allocation2 + $0x230] sm:$0xff] %vm97, %v83
    %169 = vst.msk [vmem:[#allocation2 + $0x238] sm:$0xff] %vm97, %v84
    %170 = vst.msk [vmem:[#allocation2 + $0x240] sm:$0xff] %vm97, %v85
    %171 = vst.msk [vmem:[#allocation2 + $0x248] sm:$0xff] %vm97, %v86
    %172 = vst.msk [vmem:[#allocation2 + $0x250] sm:$0xff] %vm97, %v87
    %173 = vst.msk [vmem:[#allocation2 + $0x258] sm:$0xff] %vm97, %v88
    %174 = vst.msk [vmem:[#allocation2 + $0x260] sm:$0xff] %vm97, %v89
    %175 = vst.msk [vmem:[#allocation2 + $0x268] sm:$0xff] %vm97, %v90
    %176 = vst.msk [vmem:[#allocation2 + $0x270] sm:$0xff] %vm97, %v91
    %177 = vst.msk [vmem:[#allocation2 + $0x278] sm:$0xff] %vm97, %v92
    %178 = vst.msk [vmem:[#allocation2 + $0x280] sm:$0xff] %vm97, %v93
    %179 = vst.msk [vmem:[#allocation2 + $0x288] sm:$0xff] %vm97, %v94
    %180 = vst.msk [vmem:[#allocation2 + $0x290] sm:$0xff] %vm97, %v95
    %181 = vst.msk [vmem:[#allocation2 + $0x298] sm:$0xff] %vm97, %v96
    %v182 = vld [vmem:[%s1] sm:$0xff]
    %v183 = vld [vmem:[%s1 + $0x8] sm:$0xff]
    %v184 = vld [vmem:[%s1 + $0x10] sm:$0xff]
    %v185 = vld [vmem:[%s1 + $0x18] sm:$0xff]
    %v186 = vld [vmem:[%s1 + $0x20] sm:$0xff]
    %v187 = vld [vmem:[%s1 + $0x28] sm:$0xff]
    %v188 = vld [vmem:[%s1 + $0x30] sm:$0xff]
    %v189 = vld [vmem:[%s1 + $0x38] sm:$0xff]
    %v190 = vld [vmem:[%s1 + $0x40] sm:$0xff]
    %v191 = vld [vmem:[%s1 + $0x48] sm:$0xff]
    %v192 = vld [vmem:[%s1 + $0x50] sm:$0xff]
    %v193 = vld [vmem:[%s1 + $0x58] sm:$0xff]
    %v194 = vld [vmem:[%s1 + $0x60] sm:$0xff]
    %v195 = vld [vmem:[%s1 + $0x68] sm:$0xff]
    %v196 = vld [vmem:[%s1 + $0x70] sm:$0xff]
    %v197 = vld [vmem:[%s1 + $0x78] sm:$0xff]
    %v198 = vld [vmem:[%s1 + $0x80] sm:$0xff]
    %v199 = vld [vmem:[%s1 + $0x88] sm:$0xff]
    %v200 = vld [vmem:[%s1 + $0x90] sm:$0xff]
    %v201 = vld [vmem:[%s1 + $0x98] sm:$0xff]
    %v202 = vld [vmem:[%s1 + $0xa0] sm:$0xff]
    %v203 = vld [vmem:[%s1 + $0xa8] sm:$0xff]
    %v204 = vld [vmem:[%s1 + $0xb0] sm:$0xff]
    %v205 = vld [vmem:[%s1 + $0xb8] sm:$0xff]
    %v206 = vld [vmem:[%s1 + $0xc0] sm:$0xff]
    %v207 = vld [vmem:[%s1 + $0xc8] sm:$0xff]
    %v208 = vld [vmem:[%s1 + $0xd0] sm:$0xff]
    %v209 = vld [vmem:[%s1 + $0xd8] sm:$0xff]
    %v210 = vld [vmem:[%s1 + $0xe0] sm:$0xff]
    %v211 = vld [vmem:[%s1 + $0xe8] sm:$0xff]
    %v212 = vld [vmem:[%s1 + $0xf0] sm:$0xff]
    %v213 = vld [vmem:[%s1 + $0xf8] sm:$0xff]
    %v214 = vld [vmem:[%s1 + $0x100] sm:$0xff]
    %v215 = vld [vmem:[%s1 + $0x108] sm:$0xff]
    %v216 = vld [vmem:[%s1 + $0x110] sm:$0xff]
    %v217 = vld [vmem:[%s1 + $0x118] sm:$0xff]
    %v218 = vld [vmem:[%s1 + $0x120] sm:$0xff]
    %v219 = vld [vmem:[%s1 + $0x128] sm:$0xff]
    %v220 = vld [vmem:[%s1 + $0x130] sm:$0xff]
    %v221 = vld [vmem:[%s1 + $0x138] sm:$0xff]
    %v222 = vld [vmem:[%s1 + $0x140] sm:$0xff]
    %v223 = vld [vmem:[%s1 + $0x148] sm:$0xff]
    %v224 = vld [vmem:[%s1 + $0x150] sm:$0xff]
    %v225 = vld [vmem:[%s1 + $0x158] sm:$0xff]
    %v226 = vld [vmem:[%s1 + $0x160] sm:$0xff]
    %v227 = vld [vmem:[%s1 + $0x168] sm:$0xff]
    %v228 = vld [vmem:[%s1 + $0x170] sm:$0xff]
    %v229 = vld [vmem:[%s1 + $0x178] sm:$0xff]
    %v230 = vld [vmem:[%s1 + $0x180] sm:$0xff]
    %v231 = vld [vmem:[%s1 + $0x188] sm:$0xff]
    %v232 = vld [vmem:[%s1 + $0x190] sm:$0xff]
    %v233 = vld [vmem:[%s1 + $0x198] sm:$0xff]
    %v234 = vld [vmem:[%s1 + $0x1a0] sm:$0xff]
    %v235 = vld [vmem:[%s1 + $0x1a8] sm:$0xff]
    %v236 = vld [vmem:[%s1 + $0x1b0] sm:$0xff]
    %v237 = vld [vmem:[%s1 + $0x1b8] sm:$0xff]
    %v238 = vld [vmem:[%s1 + $0x1c0] sm:$0xff]
    %v239 = vld [vmem:[%s1 + $0x1c8] sm:$0xff]
    %v240 = vld [vmem:[%s1 + $0x1d0] sm:$0xff]
    %v241 = vld [vmem:[%s1 + $0x1d8] sm:$0xff]
    %v242 = vld [vmem:[%s1 + $0x1e0] sm:$0xff]
    %v243 = vld [vmem:[%s1 + $0x1e8] sm:$0xff]
    %v244 = vld [vmem:[%s1 + $0x1f0] sm:$0xff]
    %v245 = vld [vmem:[%s1 + $0x1f8] sm:$0xff]
    %v246 = vld [vmem:[%s1 + $0x200] sm:$0xff]
    %v247 = vld [vmem:[%s1 + $0x208] sm:$0xff]
    %v248 = vld [vmem:[%s1 + $0x210] sm:$0xff]
    %v249 = vld [vmem:[%s1 + $0x218] sm:$0xff]
    %v250 = vld [vmem:[%s1 + $0x220] sm:$0xff]
    %v251 = vld [vmem:[%s1 + $0x228] sm:$0xff]
    %v252 = vld [vmem:[%s1 + $0x230] sm:$0xff]
    %v253 = vld [vmem:[%s1 + $0x238] sm:$0xff]
    %v254 = vld [vmem:[%s1 + $0x240] sm:$0xff]
    %v255 = vld [vmem:[%s1 + $0x248] sm:$0xff]
    %v256 = vld [vmem:[%s1 + $0x250] sm:$0xff]
    %v257 = vld [vmem:[%s1 + $0x258] sm:$0xff]
    %v258 = vld [vmem:[%s1 + $0x260] sm:$0xff]
    %v259 = vld [vmem:[%s1 + $0x268] sm:$0xff]
    %v260 = vld [vmem:[%s1 + $0x270] sm:$0xff]
    %v261 = vld [vmem:[%s1 + $0x278] sm:$0xff]
    %v262 = vld [vmem:[%s1 + $0x280] sm:$0xff]
    %v263 = vld [vmem:[%s1 + $0x288] sm:$0xff]
    %v264 = vld [vmem:[%s1 + $0x290] sm:$0xff]
    %v265 = vld [vmem:[%s1 + $0x298] sm:$0xff]
    %266 = vst.msk [vmem:[#allocation3] sm:$0xff] %vm97, %v182
    %267 = vst.msk [vmem:[#allocation3 + $0x8] sm:$0xff] %vm97, %v183
    %268 = vst.msk [vmem:[#allocation3 + $0x10] sm:$0xff] %vm97, %v184
    %269 = vst.msk [vmem:[#allocation3 + $0x18] sm:$0xff] %vm97, %v185
    %270 = vst.msk [vmem:[#allocation3 + $0x20] sm:$0xff] %vm97, %v186
    %271 = vst.msk [vmem:[#allocation3 + $0x28] sm:$0xff] %vm97, %v187
    %272 = vst.msk [vmem:[#allocation3 + $0x30] sm:$0xff] %vm97, %v188
    %273 = vst.msk [vmem:[#allocation3 + $0x38] sm:$0xff] %vm97, %v189
    %274 = vst.msk [vmem:[#allocation3 + $0x40] sm:$0xff] %vm97, %v190
    %275 = vst.msk [vmem:[#allocation3 + $0x48] sm:$0xff] %vm97, %v191
    %276 = vst.msk [vmem:[#allocation3 + $0x50] sm:$0xff] %vm97, %v192
    %277 = vst.msk [vmem:[#allocation3 + $0x58] sm:$0xff] %vm97, %v193
    %278 = vst.msk [vmem:[#allocation3 + $0x60] sm:$0xff] %vm97, %v194
    %279 = vst.msk [vmem:[#allocation3 + $0x68] sm:$0xff] %vm97, %v195
    %280 = vst.msk [vmem:[#allocation3 + $0x70] sm:$0xff] %vm97, %v196
    %281 = vst.msk [vmem:[#allocation3 + $0x78] sm:$0xff] %vm97, %v197
    %282 = vst.msk [vmem:[#allocation3 + $0x80] sm:$0xff] %vm97, %v198
    %283 = vst.msk [vmem:[#allocation3 + $0x88] sm:$0xff] %vm97, %v199
    %284 = vst.msk [vmem:[#allocation3 + $0x90] sm:$0xff] %vm97, %v200
    %285 = vst.msk [vmem:[#allocation3 + $0x98] sm:$0xff] %vm97, %v201
    %286 = vst.msk [vmem:[#allocation3 + $0xa0] sm:$0xff] %vm97, %v202
    %287 = vst.msk [vmem:[#allocation3 + $0xa8] sm:$0xff] %vm97, %v203
    %288 = vst.msk [vmem:[#allocation3 + $0xb0] sm:$0xff] %vm97, %v204
    %289 = vst.msk [vmem:[#allocation3 + $0xb8] sm:$0xff] %vm97, %v205
    %290 = vst.msk [vmem:[#allocation3 + $0xc0] sm:$0xff] %vm97, %v206
    %291 = vst.msk [vmem:[#allocation3 + $0xc8] sm:$0xff] %vm97, %v207
    %292 = vst.msk [vmem:[#allocation3 + $0xd0] sm:$0xff] %vm97, %v208
    %293 = vst.msk [vmem:[#allocation3 + $0xd8] sm:$0xff] %vm97, %v209
    %294 = vst.msk [vmem:[#allocation3 + $0xe0] sm:$0xff] %vm97, %v210
    %295 = vst.msk [vmem:[#allocation3 + $0xe8] sm:$0xff] %vm97, %v211
    %296 = vst.msk [vmem:[#allocation3 + $0xf0] sm:$0xff] %vm97, %v212
    %297 = vst.msk [vmem:[#allocation3 + $0xf8] sm:$0xff] %vm97, %v213
    %298 = vst.msk [vmem:[#allocation3 + $0x100] sm:$0xff] %vm97, %v214
    %299 = vst.msk [vmem:[#allocation3 + $0x108] sm:$0xff] %vm97, %v215
    %300 = vst.msk [vmem:[#allocation3 + $0x110] sm:$0xff] %vm97, %v216
    %301 = vst.msk [vmem:[#allocation3 + $0x118] sm:$0xff] %vm97, %v217
    %302 = vst.msk [vmem:[#allocation3 + $0x120] sm:$0xff] %vm97, %v218
    %303 = vst.msk [vmem:[#allocation3 + $0x128] sm:$0xff] %vm97, %v219
    %304 = vst.msk [vmem:[#allocation3 + $0x130] sm:$0xff] %vm97, %v220
    %305 = vst.msk [vmem:[#allocation3 + $0x138] sm:$0xff] %vm97, %v221
    %306 = vst.msk [vmem:[#allocation3 + $0x140] sm:$0xff] %vm97, %v222
    %307 = vst.msk [vmem:[#allocation3 + $0x148] sm:$0xff] %vm97, %v223
    %308 = vst.msk [vmem:[#allocation3 + $0x150] sm:$0xff] %vm97, %v224
    %309 = vst.msk [vmem:[#allocation3 + $0x158] sm:$0xff] %vm97, %v225
    %310 = vst.msk [vmem:[#allocation3 + $0x160] sm:$0xff] %vm97, %v226
    %311 = vst.msk [vmem:[#allocation3 + $0x168] sm:$0xff] %vm97, %v227
    %312 = vst.msk [vmem:[#allocation3 + $0x170] sm:$0xff] %vm97, %v228
    %313 = vst.msk [vmem:[#allocation3 + $0x178] sm:$0xff] %vm97, %v229
    %314 = vst.msk [vmem:[#allocation3 + $0x180] sm:$0xff] %vm97, %v230
    %315 = vst.msk [vmem:[#allocation3 + $0x188] sm:$0xff] %vm97, %v231
    %316 = vst.msk [vmem:[#allocation3 + $0x190] sm:$0xff] %vm97, %v232
    %317 = vst.msk [vmem:[#allocation3 + $0x198] sm:$0xff] %vm97, %v233
    %318 = vst.msk [vmem:[#allocation3 + $0x1a0] sm:$0xff] %vm97, %v234
    %319 = vst.msk [vmem:[#allocation3 + $0x1a8] sm:$0xff] %vm97, %v235
    %320 = vst.msk [vmem:[#allocation3 + $0x1b0] sm:$0xff] %vm97, %v236
    %321 = vst.msk [vmem:[#allocation3 + $0x1b8] sm:$0xff] %vm97, %v237
    %322 = vst.msk [vmem:[#allocation3 + $0x1c0] sm:$0xff] %vm97, %v238
    %323 = vst.msk [vmem:[#allocation3 + $0x1c8] sm:$0xff] %vm97, %v239
    %324 = vst.msk [vmem:[#allocation3 + $0x1d0] sm:$0xff] %vm97, %v240
    %325 = vst.msk [vmem:[#allocation3 + $0x1d8] sm:$0xff] %vm97, %v241
    %326 = vst.msk [vmem:[#allocation3 + $0x1e0] sm:$0xff] %vm97, %v242
    %327 = vst.msk [vmem:[#allocation3 + $0x1e8] sm:$0xff] %vm97, %v243
    %328 = vst.msk [vmem:[#allocation3 + $0x1f0] sm:$0xff] %vm97, %v244
    %329 = vst.msk [vmem:[#allocation3 + $0x1f8] sm:$0xff] %vm97, %v245
    %330 = vst.msk [vmem:[#allocation3 + $0x200] sm:$0xff] %vm97, %v246
    %331 = vst.msk [vmem:[#allocation3 + $0x208] sm:$0xff] %vm97, %v247
    %332 = vst.msk [vmem:[#allocation3 + $0x210] sm:$0xff] %vm97, %v248
    %333 = vst.msk [vmem:[#allocation3 + $0x218] sm:$0xff] %vm97, %v249
    %334 = vst.msk [vmem:[#allocation3 + $0x220] sm:$0xff] %vm97, %v250
    %335 = vst.msk [vmem:[#allocation3 + $0x228] sm:$0xff] %vm97, %v251
    %336 = vst.msk [vmem:[#allocation3 + $0x230] sm:$0xff] %vm97, %v252
    %337 = vst.msk [vmem:[#allocation3 + $0x238] sm:$0xff] %vm97, %v253
    %338 = vst.msk [vmem:[#allocation3 + $0x240] sm:$0xff] %vm97, %v254
    %339 = vst.msk [vmem:[#allocation3 + $0x248] sm:$0xff] %vm97, %v255
    %340 = vst.msk [vmem:[#allocation3 + $0x250] sm:$0xff] %vm97, %v256
    %341 = vst.msk [vmem:[#allocation3 + $0x258] sm:$0xff] %vm97, %v257
    %342 = vst.msk [vmem:[#allocation3 + $0x260] sm:$0xff] %vm97, %v258
    %343 = vst.msk [vmem:[#allocation3 + $0x268] sm:$0xff] %vm97, %v259
    %344 = vst.msk [vmem:[#allocation3 + $0x270] sm:$0xff] %vm97, %v260
    %345 = vst.msk [vmem:[#allocation3 + $0x278] sm:$0xff] %vm97, %v261
    %346 = vst.msk [vmem:[#allocation3 + $0x280] sm:$0xff] %vm97, %v262
    %347 = vst.msk [vmem:[#allocation3 + $0x288] sm:$0xff] %vm97, %v263
    %348 = vst.msk [vmem:[#allocation3 + $0x290] sm:$0xff] %vm97, %v264
    %349 = vst.msk [vmem:[#allocation3 + $0x298] sm:$0xff] %vm97, %v265
    // Predicated region
    $region10: #{tpu_custom_call.1} parent=1 // pred_check
      _
    $region11: #{tpu_custom_call.1} parent=1 // pred_check_branch
      %351 = sbr.rel (0) target = $region13
    $region12: #{tpu_custom_call.1} parent=1 // pred_region
      // Predicated region
      $region14: #{tpu_custom_call.1} parent=12 // pred_check
        _
      $region15: #{tpu_custom_call.1} parent=12 // pred_check_branch
        %353 = sbr.rel (0) target = $region17
      $region16: #{tpu_custom_call.1} parent=12 // pred_region
        // Predicated region
        $region18: #{tpu_custom_call.1} parent=16 // pred_check
          _
        $region19: #{tpu_custom_call.1} parent=16 // pred_check_branch
          %355 = sbr.rel (0) target = $region21
        $region20: #{tpu_custom_call.1} parent=16 // pred_region
          // Predicated region
          $region33: #{tpu_custom_call.1} parent=20 // pred_check
            _
          $region34: #{tpu_custom_call.1} parent=20 // pred_check_branch
            %528 = sbr.rel (0) target = $region36
          $region35: #{tpu_custom_call.1} parent=20 // pred_region
            loop: start=0, step=1, limit=1
            $region37: #{tpu_custom_call.1} parent=35 // loop_pre_header
              _
            $region38: #{tpu_custom_call.1} parent=35 // loop_header
              %s530 = sphi 0, %s534
              %p531 = scmp.ge.s32.totalorder %s530, 1
              %s535 = sphi [#allocation2], [#allocation2]
              %s536 = sphi %s2, %s2
            $region39: #{tpu_custom_call.1} parent=35 // loop_header_branch
              %533 = sbr.rel (%p531) target = $region43
            $region40: #{tpu_custom_call.1} parent=35 // loop_body
              %v537 = vld [vmem:[%s535] sm:$0xff]
              %538 = vst [vmem:[%s536] sm:$0xff] %v537
              %v539 = vld [vmem:[%s535 + $0x8] sm:$0xff]
              %540 = vst [vmem:[%s536 + $0x8] sm:$0xff] %v539
              %v541 = vld [vmem:[%s535 + $0x10] sm:$0xff]
              %542 = vst [vmem:[%s536 + $0x10] sm:$0xff] %v541
              %v543 = vld [vmem:[%s535 + $0x18] sm:$0xff]
              %544 = vst [vmem:[%s536 + $0x18] sm:$0xff] %v543
              %v545 = vld [vmem:[%s535 + $0x20] sm:$0xff]
              %546 = vst [vmem:[%s536 + $0x20] sm:$0xff] %v545
              %v547 = vld [vmem:[%s535 + $0x28] sm:$0xff]
              %548 = vst [vmem:[%s536 + $0x28] sm:$0xff] %v547
              %v549 = vld [vmem:[%s535 + $0x30] sm:$0xff]
              %550 = vst [vmem:[%s536 + $0x30] sm:$0xff] %v549
              %v551 = vld [vmem:[%s535 + $0x38] sm:$0xff]
              %552 = vst [vmem:[%s536 + $0x38] sm:$0xff] %v551
              %v553 = vld [vmem:[%s535 + $0x40] sm:$0xff]
              %554 = vst [vmem:[%s536 + $0x40] sm:$0xff] %v553
              %v555 = vld [vmem:[%s535 + $0x48] sm:$0xff]
              %556 = vst [vmem:[%s536 + $0x48] sm:$0xff] %v555
              %v557 = vld [vmem:[%s535 + $0x50] sm:$0xff]
              %558 = vst [vmem:[%s536 + $0x50] sm:$0xff] %v557
              %v559 = vld [vmem:[%s535 + $0x58] sm:$0xff]
              %560 = vst [vmem:[%s536 + $0x58] sm:$0xff] %v559
              %v561 = vld [vmem:[%s535 + $0x60] sm:$0xff]
              %562 = vst [vmem:[%s536 + $0x60] sm:$0xff] %v561
              %v563 = vld [vmem:[%s535 + $0x68] sm:$0xff]
              %564 = vst [vmem:[%s536 + $0x68] sm:$0xff] %v563
              %v565 = vld [vmem:[%s535 + $0x70] sm:$0xff]
              %566 = vst [vmem:[%s536 + $0x70] sm:$0xff] %v565
              %v567 = vld [vmem:[%s535 + $0x78] sm:$0xff]
              %568 = vst [vmem:[%s536 + $0x78] sm:$0xff] %v567
              %v569 = vld [vmem:[%s535 + $0x80] sm:$0xff]
              %570 = vst [vmem:[%s536 + $0x80] sm:$0xff] %v569
              %v571 = vld [vmem:[%s535 + $0x88] sm:$0xff]
              %572 = vst [vmem:[%s536 + $0x88] sm:$0xff] %v571
              %v573 = vld [vmem:[%s535 + $0x90] sm:$0xff]
              %574 = vst [vmem:[%s536 + $0x90] sm:$0xff] %v573
              %v575 = vld [vmem:[%s535 + $0x98] sm:$0xff]
              %576 = vst [vmem:[%s536 + $0x98] sm:$0xff] %v575
              %v577 = vld [vmem:[%s535 + $0xa0] sm:$0xff]
              %578 = vst [vmem:[%s536 + $0xa0] sm:$0xff] %v577
              %v579 = vld [vmem:[%s535 + $0xa8] sm:$0xff]
              %580 = vst [vmem:[%s536 + $0xa8] sm:$0xff] %v579
              %v581 = vld [vmem:[%s535 + $0xb0] sm:$0xff]
              %582 = vst [vmem:[%s536 + $0xb0] sm:$0xff] %v581
              %v583 = vld [vmem:[%s535 + $0xb8] sm:$0xff]
              %584 = vst [vmem:[%s536 + $0xb8] sm:$0xff] %v583
              %v585 = vld [vmem:[%s535 + $0xc0] sm:$0xff]
              %586 = vst [vmem:[%s536 + $0xc0] sm:$0xff] %v585
              %v587 = vld [vmem:[%s535 + $0xc8] sm:$0xff]
              %588 = vst [vmem:[%s536 + $0xc8] sm:$0xff] %v587
              %v589 = vld [vmem:[%s535 + $0xd0] sm:$0xff]
              %590 = vst [vmem:[%s536 + $0xd0] sm:$0xff] %v589
              %v591 = vld [vmem:[%s535 + $0xd8] sm:$0xff]
              %592 = vst [vmem:[%s536 + $0xd8] sm:$0xff] %v591
              %v593 = vld [vmem:[%s535 + $0xe0] sm:$0xff]
              %594 = vst [vmem:[%s536 + $0xe0] sm:$0xff] %v593
              %v595 = vld [vmem:[%s535 + $0xe8] sm:$0xff]
              %596 = vst [vmem:[%s536 + $0xe8] sm:$0xff] %v595
              %v597 = vld [vmem:[%s535 + $0xf0] sm:$0xff]
              %598 = vst [vmem:[%s536 + $0xf0] sm:$0xff] %v597
              %v599 = vld [vmem:[%s535 + $0xf8] sm:$0xff]
              %600 = vst [vmem:[%s536 + $0xf8] sm:$0xff] %v599
              %v601 = vld [vmem:[%s535 + $0x100] sm:$0xff]
              %602 = vst [vmem:[%s536 + $0x100] sm:$0xff] %v601
              %v603 = vld [vmem:[%s535 + $0x108] sm:$0xff]
              %604 = vst [vmem:[%s536 + $0x108] sm:$0xff] %v603
              %v605 = vld [vmem:[%s535 + $0x110] sm:$0xff]
              %606 = vst [vmem:[%s536 + $0x110] sm:$0xff] %v605
              %v607 = vld [vmem:[%s535 + $0x118] sm:$0xff]
              %608 = vst [vmem:[%s536 + $0x118] sm:$0xff] %v607
              %v609 = vld [vmem:[%s535 + $0x120] sm:$0xff]
              %610 = vst [vmem:[%s536 + $0x120] sm:$0xff] %v609
              %v611 = vld [vmem:[%s535 + $0x128] sm:$0xff]
              %612 = vst [vmem:[%s536 + $0x128] sm:$0xff] %v611
              %v613 = vld [vmem:[%s535 + $0x130] sm:$0xff]
              %614 = vst [vmem:[%s536 + $0x130] sm:$0xff] %v613
              %v615 = vld [vmem:[%s535 + $0x138] sm:$0xff]
              %616 = vst [vmem:[%s536 + $0x138] sm:$0xff] %v615
              %v617 = vld [vmem:[%s535 + $0x140] sm:$0xff]
              %618 = vst [vmem:[%s536 + $0x140] sm:$0xff] %v617
              %v619 = vld [vmem:[%s535 + $0x148] sm:$0xff]
              %620 = vst [vmem:[%s536 + $0x148] sm:$0xff] %v619
              %v621 = vld [vmem:[%s535 + $0x150] sm:$0xff]
              %622 = vst [vmem:[%s536 + $0x150] sm:$0xff] %v621
              %v623 = vld [vmem:[%s535 + $0x158] sm:$0xff]
              %624 = vst [vmem:[%s536 + $0x158] sm:$0xff] %v623
              %v625 = vld [vmem:[%s535 + $0x160] sm:$0xff]
              %626 = vst [vmem:[%s536 + $0x160] sm:$0xff] %v625
              %v627 = vld [vmem:[%s535 + $0x168] sm:$0xff]
              %628 = vst [vmem:[%s536 + $0x168] sm:$0xff] %v627
              %v629 = vld [vmem:[%s535 + $0x170] sm:$0xff]
              %630 = vst [vmem:[%s536 + $0x170] sm:$0xff] %v629
              %v631 = vld [vmem:[%s535 + $0x178] sm:$0xff]
              %632 = vst [vmem:[%s536 + $0x178] sm:$0xff] %v631
              %v633 = vld [vmem:[%s535 + $0x180] sm:$0xff]
              %634 = vst [vmem:[%s536 + $0x180] sm:$0xff] %v633
              %v635 = vld [vmem:[%s535 + $0x188] sm:$0xff]
              %636 = vst [vmem:[%s536 + $0x188] sm:$0xff] %v635
              %v637 = vld [vmem:[%s535 + $0x190] sm:$0xff]
              %638 = vst [vmem:[%s536 + $0x190] sm:$0xff] %v637
              %v639 = vld [vmem:[%s535 + $0x198] sm:$0xff]
              %640 = vst [vmem:[%s536 + $0x198] sm:$0xff] %v639
              %v641 = vld [vmem:[%s535 + $0x1a0] sm:$0xff]
              %642 = vst [vmem:[%s536 + $0x1a0] sm:$0xff] %v641
              %v643 = vld [vmem:[%s535 + $0x1a8] sm:$0xff]
              %644 = vst [vmem:[%s536 + $0x1a8] sm:$0xff] %v643
              %v645 = vld [vmem:[%s535 + $0x1b0] sm:$0xff]
              %646 = vst [vmem:[%s536 + $0x1b0] sm:$0xff] %v645
              %v647 = vld [vmem:[%s535 + $0x1b8] sm:$0xff]
              %648 = vst [vmem:[%s536 + $0x1b8] sm:$0xff] %v647
              %v649 = vld [vmem:[%s535 + $0x1c0] sm:$0xff]
              %650 = vst [vmem:[%s536 + $0x1c0] sm:$0xff] %v649
              %v651 = vld [vmem:[%s535 + $0x1c8] sm:$0xff]
              %652 = vst [vmem:[%s536 + $0x1c8] sm:$0xff] %v651
              %v653 = vld [vmem:[%s535 + $0x1d0] sm:$0xff]
              %654 = vst [vmem:[%s536 + $0x1d0] sm:$0xff] %v653
              %v655 = vld [vmem:[%s535 + $0x1d8] sm:$0xff]
              %656 = vst [vmem:[%s536 + $0x1d8] sm:$0xff] %v655
              %v657 = vld [vmem:[%s535 + $0x1e0] sm:$0xff]
              %658 = vst [vmem:[%s536 + $0x1e0] sm:$0xff] %v657
              %v659 = vld [vmem:[%s535 + $0x1e8] sm:$0xff]
              %660 = vst [vmem:[%s536 + $0x1e8] sm:$0xff] %v659
              %v661 = vld [vmem:[%s535 + $0x1f0] sm:$0xff]
              %662 = vst [vmem:[%s536 + $0x1f0] sm:$0xff] %v661
              %v663 = vld [vmem:[%s535 + $0x1f8] sm:$0xff]
              %664 = vst [vmem:[%s536 + $0x1f8] sm:$0xff] %v663
              %v665 = vld [vmem:[%s535 + $0x200] sm:$0xff]
              %666 = vst [vmem:[%s536 + $0x200] sm:$0xff] %v665
              %v667 = vld [vmem:[%s535 + $0x208] sm:$0xff]
              %668 = vst [vmem:[%s536 + $0x208] sm:$0xff] %v667
              %v669 = vld [vmem:[%s535 + $0x210] sm:$0xff]
              %670 = vst [vmem:[%s536 + $0x210] sm:$0xff] %v669
              %v671 = vld [vmem:[%s535 + $0x218] sm:$0xff]
              %672 = vst [vmem:[%s536 + $0x218] sm:$0xff] %v671
              %v673 = vld [vmem:[%s535 + $0x220] sm:$0xff]
              %674 = vst [vmem:[%s536 + $0x220] sm:$0xff] %v673
              %v675 = vld [vmem:[%s535 + $0x228] sm:$0xff]
              %676 = vst [vmem:[%s536 + $0x228] sm:$0xff] %v675
              %v677 = vld [vmem:[%s535 + $0x230] sm:$0xff]
              %678 = vst [vmem:[%s536 + $0x230] sm:$0xff] %v677
              %v679 = vld [vmem:[%s535 + $0x238] sm:$0xff]
              %680 = vst [vmem:[%s536 + $0x238] sm:$0xff] %v679
              %v681 = vld [vmem:[%s535 + $0x240] sm:$0xff]
              %682 = vst [vmem:[%s536 + $0x240] sm:$0xff] %v681
              %v683 = vld [vmem:[%s535 + $0x248] sm:$0xff]
              %684 = vst [vmem:[%s536 + $0x248] sm:$0xff] %v683
              %v685 = vld [vmem:[%s535 + $0x250] sm:$0xff]
              %686 = vst [vmem:[%s536 + $0x250] sm:$0xff] %v685
              %v687 = vld [vmem:[%s535 + $0x258] sm:$0xff]
              %688 = vst [vmem:[%s536 + $0x258] sm:$0xff] %v687
              %v689 = vld [vmem:[%s535 + $0x260] sm:$0xff]
              %690 = vst [vmem:[%s536 + $0x260] sm:$0xff] %v689
              %v691 = vld [vmem:[%s535 + $0x268] sm:$0xff]
              %692 = vst [vmem:[%s536 + $0x268] sm:$0xff] %v691
              %v693 = vld [vmem:[%s535 + $0x270] sm:$0xff]
              %694 = vst [vmem:[%s536 + $0x270] sm:$0xff] %v693
              %v695 = vld [vmem:[%s535 + $0x278] sm:$0xff]
              %696 = vst [vmem:[%s536 + $0x278] sm:$0xff] %v695
            $region41: #{tpu_custom_call.1} parent=35 // loop_footer
              %s534 = sadd.s32 1, %s530
            $region42: #{tpu_custom_call.1} parent=35 // loop_footer_branch
              %529 = sbr.rel target = $region38
            $region43: #{tpu_custom_call.1} parent=35 // loop_exit
              _
          $region36: #{tpu_custom_call.1} parent=20 // pred_fallthru
            _
          // Predicated region
          $region44: #{tpu_custom_call.1} parent=20 // pred_check
            _
          $region45: #{tpu_custom_call.1} parent=20 // pred_check_branch
            %698 = sbr.rel target = $region47
          $region46: #{tpu_custom_call.1} parent=20 // pred_region
            _
          $region47: #{tpu_custom_call.1} parent=20 // pred_fallthru
            _
        $region21: #{tpu_custom_call.1} parent=16 // pred_fallthru
          _
        // Predicated region
        $region22: #{tpu_custom_call.1} parent=16 // pred_check
          _
        $region23: #{tpu_custom_call.1} parent=16 // pred_check_branch
          %357 = sbr.rel target = $region25
        $region24: #{tpu_custom_call.1} parent=16 // pred_region
          loop: start=0, step=1, limit=1
          $region26: #{tpu_custom_call.1} parent=24 // loop_pre_header
            _
          $region27: #{tpu_custom_call.1} parent=24 // loop_header
            %s360 = sphi 0, %s364
            %p361 = scmp.ge.s32.totalorder %s360, 1
            %s365 = sphi [#allocation2], [#allocation2]
            %s366 = sphi %s2, %s2
          $region28: #{tpu_custom_call.1} parent=24 // loop_header_branch
            %363 = sbr.rel (%p361) target = $region32
          $region29: #{tpu_custom_call.1} parent=24 // loop_body
            %v367 = vld [vmem:[%s365] sm:$0xff]
            %368 = vst [vmem:[%s366] sm:$0xff] %v367
            %v369 = vld [vmem:[%s365 + $0x8] sm:$0xff]
            %370 = vst [vmem:[%s366 + $0x8] sm:$0xff] %v369
            %v371 = vld [vmem:[%s365 + $0x10] sm:$0xff]
            %372 = vst [vmem:[%s366 + $0x10] sm:$0xff] %v371
            %v373 = vld [vmem:[%s365 + $0x18] sm:$0xff]
            %374 = vst [vmem:[%s366 + $0x18] sm:$0xff] %v373
            %v375 = vld [vmem:[%s365 + $0x20] sm:$0xff]
            %376 = vst [vmem:[%s366 + $0x20] sm:$0xff] %v375
            %v377 = vld [vmem:[%s365 + $0x28] sm:$0xff]
            %378 = vst [vmem:[%s366 + $0x28] sm:$0xff] %v377
            %v379 = vld [vmem:[%s365 + $0x30] sm:$0xff]
            %380 = vst [vmem:[%s366 + $0x30] sm:$0xff] %v379
            %v381 = vld [vmem:[%s365 + $0x38] sm:$0xff]
            %382 = vst [vmem:[%s366 + $0x38] sm:$0xff] %v381
            %v383 = vld [vmem:[%s365 + $0x40] sm:$0xff]
            %384 = vst [vmem:[%s366 + $0x40] sm:$0xff] %v383
            %v385 = vld [vmem:[%s365 + $0x48] sm:$0xff]
            %386 = vst [vmem:[%s366 + $0x48] sm:$0xff] %v385
            %v387 = vld [vmem:[%s365 + $0x50] sm:$0xff]
            %388 = vst [vmem:[%s366 + $0x50] sm:$0xff] %v387
            %v389 = vld [vmem:[%s365 + $0x58] sm:$0xff]
            %390 = vst [vmem:[%s366 + $0x58] sm:$0xff] %v389
            %v391 = vld [vmem:[%s365 + $0x60] sm:$0xff]
            %392 = vst [vmem:[%s366 + $0x60] sm:$0xff] %v391
            %v393 = vld [vmem:[%s365 + $0x68] sm:$0xff]
            %394 = vst [vmem:[%s366 + $0x68] sm:$0xff] %v393
            %v395 = vld [vmem:[%s365 + $0x70] sm:$0xff]
            %396 = vst [vmem:[%s366 + $0x70] sm:$0xff] %v395
            %v397 = vld [vmem:[%s365 + $0x78] sm:$0xff]
            %398 = vst [vmem:[%s366 + $0x78] sm:$0xff] %v397
            %v399 = vld [vmem:[%s365 + $0x80] sm:$0xff]
            %400 = vst [vmem:[%s366 + $0x80] sm:$0xff] %v399
            %v401 = vld [vmem:[%s365 + $0x88] sm:$0xff]
            %402 = vst [vmem:[%s366 + $0x88] sm:$0xff] %v401
            %v403 = vld [vmem:[%s365 + $0x90] sm:$0xff]
            %404 = vst [vmem:[%s366 + $0x90] sm:$0xff] %v403
            %v405 = vld [vmem:[%s365 + $0x98] sm:$0xff]
            %406 = vst [vmem:[%s366 + $0x98] sm:$0xff] %v405
            %v407 = vld [vmem:[%s365 + $0xa0] sm:$0xff]
            %408 = vst [vmem:[%s366 + $0xa0] sm:$0xff] %v407
            %v409 = vld [vmem:[%s365 + $0xa8] sm:$0xff]
            %410 = vst [vmem:[%s366 + $0xa8] sm:$0xff] %v409
            %v411 = vld [vmem:[%s365 + $0xb0] sm:$0xff]
            %412 = vst [vmem:[%s366 + $0xb0] sm:$0xff] %v411
            %v413 = vld [vmem:[%s365 + $0xb8] sm:$0xff]
            %414 = vst [vmem:[%s366 + $0xb8] sm:$0xff] %v413
            %v415 = vld [vmem:[%s365 + $0xc0] sm:$0xff]
            %416 = vst [vmem:[%s366 + $0xc0] sm:$0xff] %v415
            %v417 = vld [vmem:[%s365 + $0xc8] sm:$0xff]
            %418 = vst [vmem:[%s366 + $0xc8] sm:$0xff] %v417
            %v419 = vld [vmem:[%s365 + $0xd0] sm:$0xff]
            %420 = vst [vmem:[%s366 + $0xd0] sm:$0xff] %v419
            %v421 = vld [vmem:[%s365 + $0xd8] sm:$0xff]
            %422 = vst [vmem:[%s366 + $0xd8] sm:$0xff] %v421
            %v423 = vld [vmem:[%s365 + $0xe0] sm:$0xff]
            %424 = vst [vmem:[%s366 + $0xe0] sm:$0xff] %v423
            %v425 = vld [vmem:[%s365 + $0xe8] sm:$0xff]
            %426 = vst [vmem:[%s366 + $0xe8] sm:$0xff] %v425
            %v427 = vld [vmem:[%s365 + $0xf0] sm:$0xff]
            %428 = vst [vmem:[%s366 + $0xf0] sm:$0xff] %v427
            %v429 = vld [vmem:[%s365 + $0xf8] sm:$0xff]
            %430 = vst [vmem:[%s366 + $0xf8] sm:$0xff] %v429
            %v431 = vld [vmem:[%s365 + $0x100] sm:$0xff]
            %432 = vst [vmem:[%s366 + $0x100] sm:$0xff] %v431
            %v433 = vld [vmem:[%s365 + $0x108] sm:$0xff]
            %434 = vst [vmem:[%s366 + $0x108] sm:$0xff] %v433
            %v435 = vld [vmem:[%s365 + $0x110] sm:$0xff]
            %436 = vst [vmem:[%s366 + $0x110] sm:$0xff] %v435
            %v437 = vld [vmem:[%s365 + $0x118] sm:$0xff]
            %438 = vst [vmem:[%s366 + $0x118] sm:$0xff] %v437
            %v439 = vld [vmem:[%s365 + $0x120] sm:$0xff]
            %440 = vst [vmem:[%s366 + $0x120] sm:$0xff] %v439
            %v441 = vld [vmem:[%s365 + $0x128] sm:$0xff]
            %442 = vst [vmem:[%s366 + $0x128] sm:$0xff] %v441
            %v443 = vld [vmem:[%s365 + $0x130] sm:$0xff]
            %444 = vst [vmem:[%s366 + $0x130] sm:$0xff] %v443
            %v445 = vld [vmem:[%s365 + $0x138] sm:$0xff]
            %446 = vst [vmem:[%s366 + $0x138] sm:$0xff] %v445
            %v447 = vld [vmem:[%s365 + $0x140] sm:$0xff]
            %448 = vst [vmem:[%s366 + $0x140] sm:$0xff] %v447
            %v449 = vld [vmem:[%s365 + $0x148] sm:$0xff]
            %450 = vst [vmem:[%s366 + $0x148] sm:$0xff] %v449
            %v451 = vld [vmem:[%s365 + $0x150] sm:$0xff]
            %452 = vst [vmem:[%s366 + $0x150] sm:$0xff] %v451
            %v453 = vld [vmem:[%s365 + $0x158] sm:$0xff]
            %454 = vst [vmem:[%s366 + $0x158] sm:$0xff] %v453
            %v455 = vld [vmem:[%s365 + $0x160] sm:$0xff]
            %456 = vst [vmem:[%s366 + $0x160] sm:$0xff] %v455
            %v457 = vld [vmem:[%s365 + $0x168] sm:$0xff]
            %458 = vst [vmem:[%s366 + $0x168] sm:$0xff] %v457
            %v459 = vld [vmem:[%s365 + $0x170] sm:$0xff]
            %460 = vst [vmem:[%s366 + $0x170] sm:$0xff] %v459
            %v461 = vld [vmem:[%s365 + $0x178] sm:$0xff]
            %462 = vst [vmem:[%s366 + $0x178] sm:$0xff] %v461
            %v463 = vld [vmem:[%s365 + $0x180] sm:$0xff]
            %464 = vst [vmem:[%s366 + $0x180] sm:$0xff] %v463
            %v465 = vld [vmem:[%s365 + $0x188] sm:$0xff]
            %466 = vst [vmem:[%s366 + $0x188] sm:$0xff] %v465
            %v467 = vld [vmem:[%s365 + $0x190] sm:$0xff]
            %468 = vst [vmem:[%s366 + $0x190] sm:$0xff] %v467
            %v469 = vld [vmem:[%s365 + $0x198] sm:$0xff]
            %470 = vst [vmem:[%s366 + $0x198] sm:$0xff] %v469
            %v471 = vld [vmem:[%s365 + $0x1a0] sm:$0xff]
            %472 = vst [vmem:[%s366 + $0x1a0] sm:$0xff] %v471
            %v473 = vld [vmem:[%s365 + $0x1a8] sm:$0xff]
            %474 = vst [vmem:[%s366 + $0x1a8] sm:$0xff] %v473
            %v475 = vld [vmem:[%s365 + $0x1b0] sm:$0xff]
            %476 = vst [vmem:[%s366 + $0x1b0] sm:$0xff] %v475
            %v477 = vld [vmem:[%s365 + $0x1b8] sm:$0xff]
            %478 = vst [vmem:[%s366 + $0x1b8] sm:$0xff] %v477
            %v479 = vld [vmem:[%s365 + $0x1c0] sm:$0xff]
            %480 = vst [vmem:[%s366 + $0x1c0] sm:$0xff] %v479
            %v481 = vld [vmem:[%s365 + $0x1c8] sm:$0xff]
            %482 = vst [vmem:[%s366 + $0x1c8] sm:$0xff] %v481
            %v483 = vld [vmem:[%s365 + $0x1d0] sm:$0xff]
            %484 = vst [vmem:[%s366 + $0x1d0] sm:$0xff] %v483
            %v485 = vld [vmem:[%s365 + $0x1d8] sm:$0xff]
            %486 = vst [vmem:[%s366 + $0x1d8] sm:$0xff] %v485
            %v487 = vld [vmem:[%s365 + $0x1e0] sm:$0xff]
            %488 = vst [vmem:[%s366 + $0x1e0] sm:$0xff] %v487
            %v489 = vld [vmem:[%s365 + $0x1e8] sm:$0xff]
            %490 = vst [vmem:[%s366 + $0x1e8] sm:$0xff] %v489
            %v491 = vld [vmem:[%s365 + $0x1f0] sm:$0xff]
            %492 = vst [vmem:[%s366 + $0x1f0] sm:$0xff] %v491
            %v493 = vld [vmem:[%s365 + $0x1f8] sm:$0xff]
            %494 = vst [vmem:[%s366 + $0x1f8] sm:$0xff] %v493
            %v495 = vld [vmem:[%s365 + $0x200] sm:$0xff]
            %496 = vst [vmem:[%s366 + $0x200] sm:$0xff] %v495
            %v497 = vld [vmem:[%s365 + $0x208] sm:$0xff]
            %498 = vst [vmem:[%s366 + $0x208] sm:$0xff] %v497
            %v499 = vld [vmem:[%s365 + $0x210] sm:$0xff]
            %500 = vst [vmem:[%s366 + $0x210] sm:$0xff] %v499
            %v501 = vld [vmem:[%s365 + $0x218] sm:$0xff]
            %502 = vst [vmem:[%s366 + $0x218] sm:$0xff] %v501
            %v503 = vld [vmem:[%s365 + $0x220] sm:$0xff]
            %504 = vst [vmem:[%s366 + $0x220] sm:$0xff] %v503
            %v505 = vld [vmem:[%s365 + $0x228] sm:$0xff]
            %506 = vst [vmem:[%s366 + $0x228] sm:$0xff] %v505
            %v507 = vld [vmem:[%s365 + $0x230] sm:$0xff]
            %508 = vst [vmem:[%s366 + $0x230] sm:$0xff] %v507
            %v509 = vld [vmem:[%s365 + $0x238] sm:$0xff]
            %510 = vst [vmem:[%s366 + $0x238] sm:$0xff] %v509
            %v511 = vld [vmem:[%s365 + $0x240] sm:$0xff]
            %512 = vst [vmem:[%s366 + $0x240] sm:$0xff] %v511
            %v513 = vld [vmem:[%s365 + $0x248] sm:$0xff]
            %514 = vst [vmem:[%s366 + $0x248] sm:$0xff] %v513
            %v515 = vld [vmem:[%s365 + $0x250] sm:$0xff]
            %516 = vst [vmem:[%s366 + $0x250] sm:$0xff] %v515
            %v517 = vld [vmem:[%s365 + $0x258] sm:$0xff]
            %518 = vst [vmem:[%s366 + $0x258] sm:$0xff] %v517
            %v519 = vld [vmem:[%s365 + $0x260] sm:$0xff]
            %520 = vst [vmem:[%s366 + $0x260] sm:$0xff] %v519
            %v521 = vld [vmem:[%s365 + $0x268] sm:$0xff]
            %522 = vst [vmem:[%s366 + $0x268] sm:$0xff] %v521
            %v523 = vld [vmem:[%s365 + $0x270] sm:$0xff]
            %524 = vst [vmem:[%s366 + $0x270] sm:$0xff] %v523
            %v525 = vld [vmem:[%s365 + $0x278] sm:$0xff]
            %526 = vst [vmem:[%s366 + $0x278] sm:$0xff] %v525
          $region30: #{tpu_custom_call.1} parent=24 // loop_footer
            %s364 = sadd.s32 1, %s360
          $region31: #{tpu_custom_call.1} parent=24 // loop_footer_branch
            %359 = sbr.rel target = $region27
          $region32: #{tpu_custom_call.1} parent=24 // loop_exit
            _
        $region25: #{tpu_custom_call.1} parent=16 // pred_fallthru
          _
      $region17: #{tpu_custom_call.1} parent=12 // pred_fallthru
        _
      %699 = vnop
    $region13: #{tpu_custom_call.1} parent=1 // pred_fallthru
      _
    // Predicated region
    $region48: #{tpu_custom_call.1} parent=1 // pred_check
      _
    $region49: #{tpu_custom_call.1} parent=1 // pred_check_branch
      %701 = sbr.rel (0) target = $region51
    $region50: #{tpu_custom_call.1} parent=1 // pred_region
      // Predicated region
      $region52: #{tpu_custom_call.1} parent=50 // pred_check
        _
      $region53: #{tpu_custom_call.1} parent=50 // pred_check_branch
        %703 = sbr.rel (0) target = $region55
      $region54: #{tpu_custom_call.1} parent=50 // pred_region
        // Predicated region
        $region56: #{tpu_custom_call.1} parent=54 // pred_check
          _
        $region57: #{tpu_custom_call.1} parent=54 // pred_check_branch
          %705 = sbr.rel (0) target = $region59
        $region58: #{tpu_custom_call.1} parent=54 // pred_region
          // Predicated region
          $region71: #{tpu_custom_call.1} parent=58 // pred_check
            _
          $region72: #{tpu_custom_call.1} parent=58 // pred_check_branch
            %878 = sbr.rel (0) target = $region74
          $region73: #{tpu_custom_call.1} parent=58 // pred_region
            loop: start=0, step=1, limit=1
            $region75: #{tpu_custom_call.1} parent=73 // loop_pre_header
              _
            $region76: #{tpu_custom_call.1} parent=73 // loop_header
              %s880 = sphi 0, %s884
              %p881 = scmp.ge.s32.totalorder %s880, 1
              %s885 = sphi [#allocation3], [#allocation3]
              %s886 = sphi %s3, %s3
            $region77: #{tpu_custom_call.1} parent=73 // loop_header_branch
              %883 = sbr.rel (%p881) target = $region81
            $region78: #{tpu_custom_call.1} parent=73 // loop_body
              %v887 = vld [vmem:[%s885] sm:$0xff]
              %888 = vst [vmem:[%s886] sm:$0xff] %v887
              %v889 = vld [vmem:[%s885 + $0x8] sm:$0xff]
              %890 = vst [vmem:[%s886 + $0x8] sm:$0xff] %v889
              %v891 = vld [vmem:[%s885 + $0x10] sm:$0xff]
              %892 = vst [vmem:[%s886 + $0x10] sm:$0xff] %v891
              %v893 = vld [vmem:[%s885 + $0x18] sm:$0xff]
              %894 = vst [vmem:[%s886 + $0x18] sm:$0xff] %v893
              %v895 = vld [vmem:[%s885 + $0x20] sm:$0xff]
              %896 = vst [vmem:[%s886 + $0x20] sm:$0xff] %v895
              %v897 = vld [vmem:[%s885 + $0x28] sm:$0xff]
              %898 = vst [vmem:[%s886 + $0x28] sm:$0xff] %v897
              %v899 = vld [vmem:[%s885 + $0x30] sm:$0xff]
              %900 = vst [vmem:[%s886 + $0x30] sm:$0xff] %v899
              %v901 = vld [vmem:[%s885 + $0x38] sm:$0xff]
              %902 = vst [vmem:[%s886 + $0x38] sm:$0xff] %v901
              %v903 = vld [vmem:[%s885 + $0x40] sm:$0xff]
              %904 = vst [vmem:[%s886 + $0x40] sm:$0xff] %v903
              %v905 = vld [vmem:[%s885 + $0x48] sm:$0xff]
              %906 = vst [vmem:[%s886 + $0x48] sm:$0xff] %v905
              %v907 = vld [vmem:[%s885 + $0x50] sm:$0xff]
              %908 = vst [vmem:[%s886 + $0x50] sm:$0xff] %v907
              %v909 = vld [vmem:[%s885 + $0x58] sm:$0xff]
              %910 = vst [vmem:[%s886 + $0x58] sm:$0xff] %v909
              %v911 = vld [vmem:[%s885 + $0x60] sm:$0xff]
              %912 = vst [vmem:[%s886 + $0x60] sm:$0xff] %v911
              %v913 = vld [vmem:[%s885 + $0x68] sm:$0xff]
              %914 = vst [vmem:[%s886 + $0x68] sm:$0xff] %v913
              %v915 = vld [vmem:[%s885 + $0x70] sm:$0xff]
              %916 = vst [vmem:[%s886 + $0x70] sm:$0xff] %v915
              %v917 = vld [vmem:[%s885 + $0x78] sm:$0xff]
              %918 = vst [vmem:[%s886 + $0x78] sm:$0xff] %v917
              %v919 = vld [vmem:[%s885 + $0x80] sm:$0xff]
              %920 = vst [vmem:[%s886 + $0x80] sm:$0xff] %v919
              %v921 = vld [vmem:[%s885 + $0x88] sm:$0xff]
              %922 = vst [vmem:[%s886 + $0x88] sm:$0xff] %v921
              %v923 = vld [vmem:[%s885 + $0x90] sm:$0xff]
              %924 = vst [vmem:[%s886 + $0x90] sm:$0xff] %v923
              %v925 = vld [vmem:[%s885 + $0x98] sm:$0xff]
              %926 = vst [vmem:[%s886 + $0x98] sm:$0xff] %v925
              %v927 = vld [vmem:[%s885 + $0xa0] sm:$0xff]
              %928 = vst [vmem:[%s886 + $0xa0] sm:$0xff] %v927
              %v929 = vld [vmem:[%s885 + $0xa8] sm:$0xff]
              %930 = vst [vmem:[%s886 + $0xa8] sm:$0xff] %v929
              %v931 = vld [vmem:[%s885 + $0xb0] sm:$0xff]
              %932 = vst [vmem:[%s886 + $0xb0] sm:$0xff] %v931
              %v933 = vld [vmem:[%s885 + $0xb8] sm:$0xff]
              %934 = vst [vmem:[%s886 + $0xb8] sm:$0xff] %v933
              %v935 = vld [vmem:[%s885 + $0xc0] sm:$0xff]
              %936 = vst [vmem:[%s886 + $0xc0] sm:$0xff] %v935
              %v937 = vld [vmem:[%s885 + $0xc8] sm:$0xff]
              %938 = vst [vmem:[%s886 + $0xc8] sm:$0xff] %v937
              %v939 = vld [vmem:[%s885 + $0xd0] sm:$0xff]
              %940 = vst [vmem:[%s886 + $0xd0] sm:$0xff] %v939
              %v941 = vld [vmem:[%s885 + $0xd8] sm:$0xff]
              %942 = vst [vmem:[%s886 + $0xd8] sm:$0xff] %v941
              %v943 = vld [vmem:[%s885 + $0xe0] sm:$0xff]
              %944 = vst [vmem:[%s886 + $0xe0] sm:$0xff] %v943
              %v945 = vld [vmem:[%s885 + $0xe8] sm:$0xff]
              %946 = vst [vmem:[%s886 + $0xe8] sm:$0xff] %v945
              %v947 = vld [vmem:[%s885 + $0xf0] sm:$0xff]
              %948 = vst [vmem:[%s886 + $0xf0] sm:$0xff] %v947
              %v949 = vld [vmem:[%s885 + $0xf8] sm:$0xff]
              %950 = vst [vmem:[%s886 + $0xf8] sm:$0xff] %v949
              %v951 = vld [vmem:[%s885 + $0x100] sm:$0xff]
              %952 = vst [vmem:[%s886 + $0x100] sm:$0xff] %v951
              %v953 = vld [vmem:[%s885 + $0x108] sm:$0xff]
              %954 = vst [vmem:[%s886 + $0x108] sm:$0xff] %v953
              %v955 = vld [vmem:[%s885 + $0x110] sm:$0xff]
              %956 = vst [vmem:[%s886 + $0x110] sm:$0xff] %v955
              %v957 = vld [vmem:[%s885 + $0x118] sm:$0xff]
              %958 = vst [vmem:[%s886 + $0x118] sm:$0xff] %v957
              %v959 = vld [vmem:[%s885 + $0x120] sm:$0xff]
              %960 = vst [vmem:[%s886 + $0x120] sm:$0xff] %v959
              %v961 = vld [vmem:[%s885 + $0x128] sm:$0xff]
              %962 = vst [vmem:[%s886 + $0x128] sm:$0xff] %v961
              %v963 = vld [vmem:[%s885 + $0x130] sm:$0xff]
              %964 = vst [vmem:[%s886 + $0x130] sm:$0xff] %v963
              %v965 = vld [vmem:[%s885 + $0x138] sm:$0xff]
              %966 = vst [vmem:[%s886 + $0x138] sm:$0xff] %v965
              %v967 = vld [vmem:[%s885 + $0x140] sm:$0xff]
              %968 = vst [vmem:[%s886 + $0x140] sm:$0xff] %v967
              %v969 = vld [vmem:[%s885 + $0x148] sm:$0xff]
              %970 = vst [vmem:[%s886 + $0x148] sm:$0xff] %v969
              %v971 = vld [vmem:[%s885 + $0x150] sm:$0xff]
              %972 = vst [vmem:[%s886 + $0x150] sm:$0xff] %v971
              %v973 = vld [vmem:[%s885 + $0x158] sm:$0xff]
              %974 = vst [vmem:[%s886 + $0x158] sm:$0xff] %v973
              %v975 = vld [vmem:[%s885 + $0x160] sm:$0xff]
              %976 = vst [vmem:[%s886 + $0x160] sm:$0xff] %v975
              %v977 = vld [vmem:[%s885 + $0x168] sm:$0xff]
              %978 = vst [vmem:[%s886 + $0x168] sm:$0xff] %v977
              %v979 = vld [vmem:[%s885 + $0x170] sm:$0xff]
              %980 = vst [vmem:[%s886 + $0x170] sm:$0xff] %v979
              %v981 = vld [vmem:[%s885 + $0x178] sm:$0xff]
              %982 = vst [vmem:[%s886 + $0x178] sm:$0xff] %v981
              %v983 = vld [vmem:[%s885 + $0x180] sm:$0xff]
              %984 = vst [vmem:[%s886 + $0x180] sm:$0xff] %v983
              %v985 = vld [vmem:[%s885 + $0x188] sm:$0xff]
              %986 = vst [vmem:[%s886 + $0x188] sm:$0xff] %v985
              %v987 = vld [vmem:[%s885 + $0x190] sm:$0xff]
              %988 = vst [vmem:[%s886 + $0x190] sm:$0xff] %v987
              %v989 = vld [vmem:[%s885 + $0x198] sm:$0xff]
              %990 = vst [vmem:[%s886 + $0x198] sm:$0xff] %v989
              %v991 = vld [vmem:[%s885 + $0x1a0] sm:$0xff]
              %992 = vst [vmem:[%s886 + $0x1a0] sm:$0xff] %v991
              %v993 = vld [vmem:[%s885 + $0x1a8] sm:$0xff]
              %994 = vst [vmem:[%s886 + $0x1a8] sm:$0xff] %v993
              %v995 = vld [vmem:[%s885 + $0x1b0] sm:$0xff]
              %996 = vst [vmem:[%s886 + $0x1b0] sm:$0xff] %v995
              %v997 = vld [vmem:[%s885 + $0x1b8] sm:$0xff]
              %998 = vst [vmem:[%s886 + $0x1b8] sm:$0xff] %v997
              %v999 = vld [vmem:[%s885 + $0x1c0] sm:$0xff]
              %1000 = vst [vmem:[%s886 + $0x1c0] sm:$0xff] %v999
              %v1001 = vld [vmem:[%s885 + $0x1c8] sm:$0xff]
              %1002 = vst [vmem:[%s886 + $0x1c8] sm:$0xff] %v1001
              %v1003 = vld [vmem:[%s885 + $0x1d0] sm:$0xff]
              %1004 = vst [vmem:[%s886 + $0x1d0] sm:$0xff] %v1003
              %v1005 = vld [vmem:[%s885 + $0x1d8] sm:$0xff]
              %1006 = vst [vmem:[%s886 + $0x1d8] sm:$0xff] %v1005
              %v1007 = vld [vmem:[%s885 + $0x1e0] sm:$0xff]
              %1008 = vst [vmem:[%s886 + $0x1e0] sm:$0xff] %v1007
              %v1009 = vld [vmem:[%s885 + $0x1e8] sm:$0xff]
              %1010 = vst [vmem:[%s886 + $0x1e8] sm:$0xff] %v1009
              %v1011 = vld [vmem:[%s885 + $0x1f0] sm:$0xff]
              %1012 = vst [vmem:[%s886 + $0x1f0] sm:$0xff] %v1011
              %v1013 = vld [vmem:[%s885 + $0x1f8] sm:$0xff]
              %1014 = vst [vmem:[%s886 + $0x1f8] sm:$0xff] %v1013
              %v1015 = vld [vmem:[%s885 + $0x200] sm:$0xff]
              %1016 = vst [vmem:[%s886 + $0x200] sm:$0xff] %v1015
              %v1017 = vld [vmem:[%s885 + $0x208] sm:$0xff]
              %1018 = vst [vmem:[%s886 + $0x208] sm:$0xff] %v1017
              %v1019 = vld [vmem:[%s885 + $0x210] sm:$0xff]
              %1020 = vst [vmem:[%s886 + $0x210] sm:$0xff] %v1019
              %v1021 = vld [vmem:[%s885 + $0x218] sm:$0xff]
              %1022 = vst [vmem:[%s886 + $0x218] sm:$0xff] %v1021
              %v1023 = vld [vmem:[%s885 + $0x220] sm:$0xff]
              %1024 = vst [vmem:[%s886 + $0x220] sm:$0xff] %v1023
              %v1025 = vld [vmem:[%s885 + $0x228] sm:$0xff]
              %1026 = vst [vmem:[%s886 + $0x228] sm:$0xff] %v1025
              %v1027 = vld [vmem:[%s885 + $0x230] sm:$0xff]
              %1028 = vst [vmem:[%s886 + $0x230] sm:$0xff] %v1027
              %v1029 = vld [vmem:[%s885 + $0x238] sm:$0xff]
              %1030 = vst [vmem:[%s886 + $0x238] sm:$0xff] %v1029
              %v1031 = vld [vmem:[%s885 + $0x240] sm:$0xff]
              %1032 = vst [vmem:[%s886 + $0x240] sm:$0xff] %v1031
              %v1033 = vld [vmem:[%s885 + $0x248] sm:$0xff]
              %1034 = vst [vmem:[%s886 + $0x248] sm:$0xff] %v1033
              %v1035 = vld [vmem:[%s885 + $0x250] sm:$0xff]
              %1036 = vst [vmem:[%s886 + $0x250] sm:$0xff] %v1035
              %v1037 = vld [vmem:[%s885 + $0x258] sm:$0xff]
              %1038 = vst [vmem:[%s886 + $0x258] sm:$0xff] %v1037
              %v1039 = vld [vmem:[%s885 + $0x260] sm:$0xff]
              %1040 = vst [vmem:[%s886 + $0x260] sm:$0xff] %v1039
              %v1041 = vld [vmem:[%s885 + $0x268] sm:$0xff]
              %1042 = vst [vmem:[%s886 + $0x268] sm:$0xff] %v1041
              %v1043 = vld [vmem:[%s885 + $0x270] sm:$0xff]
              %1044 = vst [vmem:[%s886 + $0x270] sm:$0xff] %v1043
              %v1045 = vld [vmem:[%s885 + $0x278] sm:$0xff]
              %1046 = vst [vmem:[%s886 + $0x278] sm:$0xff] %v1045
            $region79: #{tpu_custom_call.1} parent=73 // loop_footer
              %s884 = sadd.s32 1, %s880
            $region80: #{tpu_custom_call.1} parent=73 // loop_footer_branch
              %879 = sbr.rel target = $region76
            $region81: #{tpu_custom_call.1} parent=73 // loop_exit
              _
          $region74: #{tpu_custom_call.1} parent=58 // pred_fallthru
            _
          // Predicated region
          $region82: #{tpu_custom_call.1} parent=58 // pred_check
            _
          $region83: #{tpu_custom_call.1} parent=58 // pred_check_branch
            %1048 = sbr.rel target = $region85
          $region84: #{tpu_custom_call.1} parent=58 // pred_region
            _
          $region85: #{tpu_custom_call.1} parent=58 // pred_fallthru
            _
        $region59: #{tpu_custom_call.1} parent=54 // pred_fallthru
          _
        // Predicated region
        $region60: #{tpu_custom_call.1} parent=54 // pred_check
          _
        $region61: #{tpu_custom_call.1} parent=54 // pred_check_branch
          %707 = sbr.rel target = $region63
        $region62: #{tpu_custom_call.1} parent=54 // pred_region
          loop: start=0, step=1, limit=1
          $region64: #{tpu_custom_call.1} parent=62 // loop_pre_header
            _
          $region65: #{tpu_custom_call.1} parent=62 // loop_header
            %s710 = sphi 0, %s714
            %p711 = scmp.ge.s32.totalorder %s710, 1
            %s715 = sphi [#allocation3], [#allocation3]
            %s716 = sphi %s3, %s3
          $region66: #{tpu_custom_call.1} parent=62 // loop_header_branch
            %713 = sbr.rel (%p711) target = $region70
          $region67: #{tpu_custom_call.1} parent=62 // loop_body
            %v717 = vld [vmem:[%s715] sm:$0xff]
            %718 = vst [vmem:[%s716] sm:$0xff] %v717
            %v719 = vld [vmem:[%s715 + $0x8] sm:$0xff]
            %720 = vst [vmem:[%s716 + $0x8] sm:$0xff] %v719
            %v721 = vld [vmem:[%s715 + $0x10] sm:$0xff]
            %722 = vst [vmem:[%s716 + $0x10] sm:$0xff] %v721
            %v723 = vld [vmem:[%s715 + $0x18] sm:$0xff]
            %724 = vst [vmem:[%s716 + $0x18] sm:$0xff] %v723
            %v725 = vld [vmem:[%s715 + $0x20] sm:$0xff]
            %726 = vst [vmem:[%s716 + $0x20] sm:$0xff] %v725
            %v727 = vld [vmem:[%s715 + $0x28] sm:$0xff]
            %728 = vst [vmem:[%s716 + $0x28] sm:$0xff] %v727
            %v729 = vld [vmem:[%s715 + $0x30] sm:$0xff]
            %730 = vst [vmem:[%s716 + $0x30] sm:$0xff] %v729
            %v731 = vld [vmem:[%s715 + $0x38] sm:$0xff]
            %732 = vst [vmem:[%s716 + $0x38] sm:$0xff] %v731
            %v733 = vld [vmem:[%s715 + $0x40] sm:$0xff]
            %734 = vst [vmem:[%s716 + $0x40] sm:$0xff] %v733
            %v735 = vld [vmem:[%s715 + $0x48] sm:$0xff]
            %736 = vst [vmem:[%s716 + $0x48] sm:$0xff] %v735
            %v737 = vld [vmem:[%s715 + $0x50] sm:$0xff]
            %738 = vst [vmem:[%s716 + $0x50] sm:$0xff] %v737
            %v739 = vld [vmem:[%s715 + $0x58] sm:$0xff]
            %740 = vst [vmem:[%s716 + $0x58] sm:$0xff] %v739
            %v741 = vld [vmem:[%s715 + $0x60] sm:$0xff]
            %742 = vst [vmem:[%s716 + $0x60] sm:$0xff] %v741
            %v743 = vld [vmem:[%s715 + $0x68] sm:$0xff]
            %744 = vst [vmem:[%s716 + $0x68] sm:$0xff] %v743
            %v745 = vld [vmem:[%s715 + $0x70] sm:$0xff]
            %746 = vst [vmem:[%s716 + $0x70] sm:$0xff] %v745
            %v747 = vld [vmem:[%s715 + $0x78] sm:$0xff]
            %748 = vst [vmem:[%s716 + $0x78] sm:$0xff] %v747
            %v749 = vld [vmem:[%s715 + $0x80] sm:$0xff]
            %750 = vst [vmem:[%s716 + $0x80] sm:$0xff] %v749
            %v751 = vld [vmem:[%s715 + $0x88] sm:$0xff]
            %752 = vst [vmem:[%s716 + $0x88] sm:$0xff] %v751
            %v753 = vld [vmem:[%s715 + $0x90] sm:$0xff]
            %754 = vst [vmem:[%s716 + $0x90] sm:$0xff] %v753
            %v755 = vld [vmem:[%s715 + $0x98] sm:$0xff]
            %756 = vst [vmem:[%s716 + $0x98] sm:$0xff] %v755
            %v757 = vld [vmem:[%s715 + $0xa0] sm:$0xff]
            %758 = vst [vmem:[%s716 + $0xa0] sm:$0xff] %v757
            %v759 = vld [vmem:[%s715 + $0xa8] sm:$0xff]
            %760 = vst [vmem:[%s716 + $0xa8] sm:$0xff] %v759
            %v761 = vld [vmem:[%s715 + $0xb0] sm:$0xff]
            %762 = vst [vmem:[%s716 + $0xb0] sm:$0xff] %v761
            %v763 = vld [vmem:[%s715 + $0xb8] sm:$0xff]
            %764 = vst [vmem:[%s716 + $0xb8] sm:$0xff] %v763
            %v765 = vld [vmem:[%s715 + $0xc0] sm:$0xff]
            %766 = vst [vmem:[%s716 + $0xc0] sm:$0xff] %v765
            %v767 = vld [vmem:[%s715 + $0xc8] sm:$0xff]
            %768 = vst [vmem:[%s716 + $0xc8] sm:$0xff] %v767
            %v769 = vld [vmem:[%s715 + $0xd0] sm:$0xff]
            %770 = vst [vmem:[%s716 + $0xd0] sm:$0xff] %v769
            %v771 = vld [vmem:[%s715 + $0xd8] sm:$0xff]
            %772 = vst [vmem:[%s716 + $0xd8] sm:$0xff] %v771
            %v773 = vld [vmem:[%s715 + $0xe0] sm:$0xff]
            %774 = vst [vmem:[%s716 + $0xe0] sm:$0xff] %v773
            %v775 = vld [vmem:[%s715 + $0xe8] sm:$0xff]
            %776 = vst [vmem:[%s716 + $0xe8] sm:$0xff] %v775
            %v777 = vld [vmem:[%s715 + $0xf0] sm:$0xff]
            %778 = vst [vmem:[%s716 + $0xf0] sm:$0xff] %v777
            %v779 = vld [vmem:[%s715 + $0xf8] sm:$0xff]
            %780 = vst [vmem:[%s716 + $0xf8] sm:$0xff] %v779
            %v781 = vld [vmem:[%s715 + $0x100] sm:$0xff]
            %782 = vst [vmem:[%s716 + $0x100] sm:$0xff] %v781
            %v783 = vld [vmem:[%s715 + $0x108] sm:$0xff]
            %784 = vst [vmem:[%s716 + $0x108] sm:$0xff] %v783
            %v785 = vld [vmem:[%s715 + $0x110] sm:$0xff]
            %786 = vst [vmem:[%s716 + $0x110] sm:$0xff] %v785
            %v787 = vld [vmem:[%s715 + $0x118] sm:$0xff]
            %788 = vst [vmem:[%s716 + $0x118] sm:$0xff] %v787
            %v789 = vld [vmem:[%s715 + $0x120] sm:$0xff]
            %790 = vst [vmem:[%s716 + $0x120] sm:$0xff] %v789
            %v791 = vld [vmem:[%s715 + $0x128] sm:$0xff]
            %792 = vst [vmem:[%s716 + $0x128] sm:$0xff] %v791
            %v793 = vld [vmem:[%s715 + $0x130] sm:$0xff]
            %794 = vst [vmem:[%s716 + $0x130] sm:$0xff] %v793
            %v795 = vld [vmem:[%s715 + $0x138] sm:$0xff]
            %796 = vst [vmem:[%s716 + $0x138] sm:$0xff] %v795
            %v797 = vld [vmem:[%s715 + $0x140] sm:$0xff]
            %798 = vst [vmem:[%s716 + $0x140] sm:$0xff] %v797
            %v799 = vld [vmem:[%s715 + $0x148] sm:$0xff]
            %800 = vst [vmem:[%s716 + $0x148] sm:$0xff] %v799
            %v801 = vld [vmem:[%s715 + $0x150] sm:$0xff]
            %802 = vst [vmem:[%s716 + $0x150] sm:$0xff] %v801
            %v803 = vld [vmem:[%s715 + $0x158] sm:$0xff]
            %804 = vst [vmem:[%s716 + $0x158] sm:$0xff] %v803
            %v805 = vld [vmem:[%s715 + $0x160] sm:$0xff]
            %806 = vst [vmem:[%s716 + $0x160] sm:$0xff] %v805
            %v807 = vld [vmem:[%s715 + $0x168] sm:$0xff]
            %808 = vst [vmem:[%s716 + $0x168] sm:$0xff] %v807
            %v809 = vld [vmem:[%s715 + $0x170] sm:$0xff]
            %810 = vst [vmem:[%s716 + $0x170] sm:$0xff] %v809
            %v811 = vld [vmem:[%s715 + $0x178] sm:$0xff]
            %812 = vst [vmem:[%s716 + $0x178] sm:$0xff] %v811
            %v813 = vld [vmem:[%s715 + $0x180] sm:$0xff]
            %814 = vst [vmem:[%s716 + $0x180] sm:$0xff] %v813
            %v815 = vld [vmem:[%s715 + $0x188] sm:$0xff]
            %816 = vst [vmem:[%s716 + $0x188] sm:$0xff] %v815
            %v817 = vld [vmem:[%s715 + $0x190] sm:$0xff]
            %818 = vst [vmem:[%s716 + $0x190] sm:$0xff] %v817
            %v819 = vld [vmem:[%s715 + $0x198] sm:$0xff]
            %820 = vst [vmem:[%s716 + $0x198] sm:$0xff] %v819
            %v821 = vld [vmem:[%s715 + $0x1a0] sm:$0xff]
            %822 = vst [vmem:[%s716 + $0x1a0] sm:$0xff] %v821
            %v823 = vld [vmem:[%s715 + $0x1a8] sm:$0xff]
            %824 = vst [vmem:[%s716 + $0x1a8] sm:$0xff] %v823
            %v825 = vld [vmem:[%s715 + $0x1b0] sm:$0xff]
            %826 = vst [vmem:[%s716 + $0x1b0] sm:$0xff] %v825
            %v827 = vld [vmem:[%s715 + $0x1b8] sm:$0xff]
            %828 = vst [vmem:[%s716 + $0x1b8] sm:$0xff] %v827
            %v829 = vld [vmem:[%s715 + $0x1c0] sm:$0xff]
            %830 = vst [vmem:[%s716 + $0x1c0] sm:$0xff] %v829
            %v831 = vld [vmem:[%s715 + $0x1c8] sm:$0xff]
            %832 = vst [vmem:[%s716 + $0x1c8] sm:$0xff] %v831
            %v833 = vld [vmem:[%s715 + $0x1d0] sm:$0xff]
            %834 = vst [vmem:[%s716 + $0x1d0] sm:$0xff] %v833
            %v835 = vld [vmem:[%s715 + $0x1d8] sm:$0xff]
            %836 = vst [vmem:[%s716 + $0x1d8] sm:$0xff] %v835
            %v837 = vld [vmem:[%s715 + $0x1e0] sm:$0xff]
            %838 = vst [vmem:[%s716 + $0x1e0] sm:$0xff] %v837
            %v839 = vld [vmem:[%s715 + $0x1e8] sm:$0xff]
            %840 = vst [vmem:[%s716 + $0x1e8] sm:$0xff] %v839
            %v841 = vld [vmem:[%s715 + $0x1f0] sm:$0xff]
            %842 = vst [vmem:[%s716 + $0x1f0] sm:$0xff] %v841
            %v843 = vld [vmem:[%s715 + $0x1f8] sm:$0xff]
            %844 = vst [vmem:[%s716 + $0x1f8] sm:$0xff] %v843
            %v845 = vld [vmem:[%s715 + $0x200] sm:$0xff]
            %846 = vst [vmem:[%s716 + $0x200] sm:$0xff] %v845
            %v847 = vld [vmem:[%s715 + $0x208] sm:$0xff]
            %848 = vst [vmem:[%s716 + $0x208] sm:$0xff] %v847
            %v849 = vld [vmem:[%s715 + $0x210] sm:$0xff]
            %850 = vst [vmem:[%s716 + $0x210] sm:$0xff] %v849
            %v851 = vld [vmem:[%s715 + $0x218] sm:$0xff]
            %852 = vst [vmem:[%s716 + $0x218] sm:$0xff] %v851
            %v853 = vld [vmem:[%s715 + $0x220] sm:$0xff]
            %854 = vst [vmem:[%s716 + $0x220] sm:$0xff] %v853
            %v855 = vld [vmem:[%s715 + $0x228] sm:$0xff]
            %856 = vst [vmem:[%s716 + $0x228] sm:$0xff] %v855
            %v857 = vld [vmem:[%s715 + $0x230] sm:$0xff]
            %858 = vst [vmem:[%s716 + $0x230] sm:$0xff] %v857
            %v859 = vld [vmem:[%s715 + $0x238] sm:$0xff]
            %860 = vst [vmem:[%s716 + $0x238] sm:$0xff] %v859
            %v861 = vld [vmem:[%s715 + $0x240] sm:$0xff]
            %862 = vst [vmem:[%s716 + $0x240] sm:$0xff] %v861
            %v863 = vld [vmem:[%s715 + $0x248] sm:$0xff]
            %864 = vst [vmem:[%s716 + $0x248] sm:$0xff] %v863
            %v865 = vld [vmem:[%s715 + $0x250] sm:$0xff]
            %866 = vst [vmem:[%s716 + $0x250] sm:$0xff] %v865
            %v867 = vld [vmem:[%s715 + $0x258] sm:$0xff]
            %868 = vst [vmem:[%s716 + $0x258] sm:$0xff] %v867
            %v869 = vld [vmem:[%s715 + $0x260] sm:$0xff]
            %870 = vst [vmem:[%s716 + $0x260] sm:$0xff] %v869
            %v871 = vld [vmem:[%s715 + $0x268] sm:$0xff]
            %872 = vst [vmem:[%s716 + $0x268] sm:$0xff] %v871
            %v873 = vld [vmem:[%s715 + $0x270] sm:$0xff]
            %874 = vst [vmem:[%s716 + $0x270] sm:$0xff] %v873
            %v875 = vld [vmem:[%s715 + $0x278] sm:$0xff]
            %876 = vst [vmem:[%s716 + $0x278] sm:$0xff] %v875
          $region68: #{tpu_custom_call.1} parent=62 // loop_footer
            %s714 = sadd.s32 1, %s710
          $region69: #{tpu_custom_call.1} parent=62 // loop_footer_branch
            %709 = sbr.rel target = $region65
          $region70: #{tpu_custom_call.1} parent=62 // loop_exit
            _
        $region63: #{tpu_custom_call.1} parent=54 // pred_fallthru
          _
      $region55: #{tpu_custom_call.1} parent=50 // pred_fallthru
        _
      %1049 = vnop
    $region51: #{tpu_custom_call.1} parent=1 // pred_fallthru
      _
    // Predicated region
    $region86: #{tpu_custom_call.1} parent=1 // pred_check
      _
    $region87: #{tpu_custom_call.1} parent=1 // pred_check_branch
      %1051 = sbr.rel (0) target = $region89
    $region88: #{tpu_custom_call.1} parent=1 // pred_region
      _
    $region89: #{tpu_custom_call.1} parent=1 // pred_fallthru
      _
    // Predicated region
    $region90: #{tpu_custom_call.1} parent=1 // pred_check
      _
    $region91: #{tpu_custom_call.1} parent=1 // pred_check_branch
      %1053 = sbr.rel (0) target = $region93
    $region92: #{tpu_custom_call.1} parent=1 // pred_region
      _
    $region93: #{tpu_custom_call.1} parent=1 // pred_fallthru
      _

</llo_original>
